<compile_context>
chip_gen: v6e
topology: v6e:2x2x1
jax: 0.10.0
libtpu: 0.0.40
codegen_flags: <defaults>
</compile_context>

<pallas_src>
import jax
import jax.numpy as jnp
from jax.experimental import pallas as pl
from jax.experimental.pallas import tpu as pltpu

EPS = 1e-5

# MXU operand dtype. Keep f32 to match PyTorch f32 numerics bit-for-bit-ish; on
# v6e/v7x set to jnp.bfloat16 for full-rate MXU (accumulation stays f32, BN stats f32).
MXU_DTYPE = jnp.float32


# --------------------------------------------------------------------------- helpers
def _zero_halo(pad_ref):
    """Zero only the 1-wide halo strips of the (H+2, W+2, C) VMEM pad scratch."""
    Hp, Wp, C = pad_ref.shape
    pad_ref[0:1, :, :] = jnp.zeros((1, Wp, C), jnp.float32)
    pad_ref[Hp - 1:Hp, :, :] = jnp.zeros((1, Wp, C), jnp.float32)
    pad_ref[:, 0:1, :] = jnp.zeros((Hp, 1, C), jnp.float32)
    pad_ref[:, Wp - 1:Wp, :] = jnp.zeros((Hp, 1, C), jnp.float32)


def _conv3x3_im2col(pad_ref, w_ref):
    """3x3 / pad=1 conv as a single im2col MXU matmul.

    pad_ref: (H+2, W+2, Cin) zero-halo'd activation in VMEM.
    w_ref:   (9*Cin, Cout) weights, row order (ky, kx, ci).
    Returns f32 (H*W, Cout).
    """
    Hp, Wp, Cin = pad_ref.shape
    H, W = Hp - 2, Wp - 2
    taps = []
    for dy in range(3):
        for dx in range(3):
            taps.append(pad_ref[dy:dy + H, dx:dx + W, :].reshape(H * W, Cin))
    patches = jnp.concatenate(taps, axis=1)                    # (H*W, 9*Cin)
    return jnp.dot(patches.astype(MXU_DTYPE), w_ref[...].astype(MXU_DTYPE),
                   preferred_element_type=jnp.float32)


def _write_partial_stats(s_ref, acc):
    """Per-image BN partials: s_ref block (1, 2, C) <- [sum, sum of squares]."""
    s_ref[0:1, 0:1, :] = jnp.sum(acc, axis=0, keepdims=True)[None]
    s_ref[0:1, 1:2, :] = jnp.sum(acc * acc, axis=0, keepdims=True)[None]


def _bn_scale_shift(s_ref, g_ref, b_ref, count):
    """Fold global batch stats + affine params into per-channel scale/shift (1, C).

    Variance is E[x^2]-E[x]^2 (clamped at 0): an exact two-pass variance would need an
    extra full pass over the conv output in this tiled structure.
    """
    tot = jnp.sum(s_ref[...], axis=0)                          # (2, C)
    mean = tot[0:1, :] / count                                 # (1, C)
    var = jnp.maximum(tot[1:2, :] / count - mean * mean, 0.0)  # biased, like PyTorch fwd
    inv = jax.lax.rsqrt(var + EPS)
    scale = g_ref[...] * inv
    shift = b_ref[...] - mean * scale
    return scale, shift


# --------------------------------------------------------------------------- kernels
def _conv1_stats_kernel(x_ref, w_ref, y_ref, s_ref, pad_ref):
    """Per image: build zero-padded input, conv1 via im2col matmul, emit BN partials."""
    H, W, Cin = x_ref.shape[1], x_ref.shape[2], x_ref.shape[3]
    _zero_halo(pad_ref)
    pad_ref[1:H + 1, 1:W + 1, :] = x_ref[0]
    acc = _conv3x3_im2col(pad_ref, w_ref)                      # (H*W, Cmid) f32
    _write_partial_stats(s_ref, acc)
    y_ref[...] = acc[None]


def _bn1_relu_conv2_stats_kernel(y1_ref, s1_ref, g1_ref, b1_ref, w2_ref,
                                 y2_ref, s2_ref, pad_ref):
    """Per image: BN1+ReLU (global batch stats), then conv2 via im2col, BN2 partials."""
    Nb = s1_ref.shape[0]
    HW, Cmid = y1_ref.shape[1], y1_ref.shape[2]
    Hp, Wp, _ = pad_ref.shape
    H, W = Hp - 2, Wp - 2
    count = Nb * HW

    scale, shift = _bn_scale_shift(s1_ref, g1_ref, b1_ref, count)
    y1 = jnp.maximum(y1_ref[0] * scale + shift, 0.0)           # BN + ReLU (fused FMA)

    _zero_halo(pad_ref)
    pad_ref[1:H + 1, 1:W + 1, :] = y1.reshape(H, W, Cmid)
    acc = _conv3x3_im2col(pad_ref, w2_ref)                     # (H*W, Cout) f32
    _write_partial_stats(s2_ref, acc)
    y2_ref[...] = acc[None]


def _bn2_relu_kernel(y2_ref, s2_ref, g2_ref, b2_ref, o_ref):
    """Per image: BN2 + ReLU with global batch stats."""
    Nb = s2_ref.shape[0]
    HW = y2_ref.shape[1]
    count = Nb * HW
    scale, shift = _bn_scale_shift(s2_ref, g2_ref, b2_ref, count)
    o_ref[...] = jnp.maximum(y2_ref[0] * scale + shift, 0.0)[None]


# --------------------------------------------------------------------------- wrapper
def double_conv(x_nchw, w1_oihw, g1, b1, w2_oihw, g2, b2):
    """x_nchw: (N,Cin,H,W); weights in PyTorch OIHW; returns (N,Cout,H,W)."""
    N, Cin, H, W = x_nchw.shape
    Cmid = w1_oihw.shape[0]
    Cout = w2_oihw.shape[0]
    HW = H * W

    # Layout glue only (compute stays in the kernels).
    x = jnp.transpose(x_nchw, (0, 2, 3, 1)).astype(jnp.float32)            # NCHW->NHWC
    w1 = jnp.transpose(w1_oihw, (2, 3, 1, 0)).reshape(9 * Cin, Cmid).astype(jnp.float32)
    w2 = jnp.transpose(w2_oihw, (2, 3, 1, 0)).reshape(9 * Cmid, Cout).astype(jnp.float32)
    g1 = g1.reshape(1, Cmid).astype(jnp.float32)
    b1 = b1.reshape(1, Cmid).astype(jnp.float32)
    g2 = g2.reshape(1, Cout).astype(jnp.float32)
    b2 = b2.reshape(1, Cout).astype(jnp.float32)

    cparams = pltpu.CompilerParams(
        dimension_semantics=("parallel",),          # batch axis -> both TCs on v7x
        vmem_limit_bytes=64 * 1024 * 1024)

    # ---- call 1: conv1 + per-image BN1 partial stats --------------------------------
    y1_raw, s1 = pl.pallas_call(
        _conv1_stats_kernel,
        grid=(N,),
        in_specs=[
            pl.BlockSpec((1, H, W, Cin), lambda i: (i, 0, 0, 0)),
            pl.BlockSpec((9 * Cin, Cmid), lambda i: (0, 0)),
        ],
        out_specs=[
            pl.BlockSpec((1, HW, Cmid), lambda i: (i, 0, 0)),
            pl.BlockSpec((1, 2, Cmid), lambda i: (i, 0, 0)),
        ],
        out_shape=[
            jax.ShapeDtypeStruct((N, HW, Cmid), jnp.float32),
            jax.ShapeDtypeStruct((N, 2, Cmid), jnp.float32),
        ],
        scratch_shapes=[pltpu.VMEM((H + 2, W + 2, Cin), jnp.float32)],
        compiler_params=cparams,
    )(x, w1)

    # ---- call 2: BN1+ReLU (global stats) fused with conv2 + BN2 partial stats -------
    y2_raw, s2 = pl.pallas_call(
        _bn1_relu_conv2_stats_kernel,
        grid=(N,),
        in_specs=[
            pl.BlockSpec((1, HW, Cmid), lambda i: (i, 0, 0)),
            pl.BlockSpec((N, 2, Cmid), lambda i: (0, 0, 0)),
            pl.BlockSpec((1, Cmid), lambda i: (0, 0)),
            pl.BlockSpec((1, Cmid), lambda i: (0, 0)),
            pl.BlockSpec((9 * Cmid, Cout), lambda i: (0, 0)),
        ],
        out_specs=[
            pl.BlockSpec((1, HW, Cout), lambda i: (i, 0, 0)),
            pl.BlockSpec((1, 2, Cout), lambda i: (i, 0, 0)),
        ],
        out_shape=[
            jax.ShapeDtypeStruct((N, HW, Cout), jnp.float32),
            jax.ShapeDtypeStruct((N, 2, Cout), jnp.float32),
        ],
        scratch_shapes=[pltpu.VMEM((H + 2, W + 2, Cmid), jnp.float32)],
        compiler_params=cparams,
    )(y1_raw, s1, g1, b1, w2)

    # ---- call 3: BN2 + ReLU ----------------------------------------------------------
    out = pl.pallas_call(
        _bn2_relu_kernel,
        grid=(N,),
        in_specs=[
            pl.BlockSpec((1, HW, Cout), lambda i: (i, 0, 0)),
            pl.BlockSpec((N, 2, Cout), lambda i: (0, 0, 0)),
            pl.BlockSpec((1, Cout), lambda i: (0, 0)),
            pl.BlockSpec((1, Cout), lambda i: (0, 0)),
        ],
        out_specs=pl.BlockSpec((1, HW, Cout), lambda i: (i, 0, 0)),
        out_shape=jax.ShapeDtypeStruct((N, HW, Cout), jnp.float32),
        compiler_params=cparams,
    )(y2_raw, s2, g2, b2)

    out = out.reshape(N, H, W, Cout)                 # metadata-only in the wrapper
    return jnp.transpose(out, (0, 3, 1, 2))          # NHWC -> NCHW


# --------------------------------------------------------------------------- reference
def reference(x, w1, g1, b1, w2, g2, b2):
    """Plain-JAX replica of the PyTorch forward (train-mode BN)."""
    def conv(y, w):
        return jax.lax.conv_general_dilated(
            y, w, (1, 1), 'SAME',
            dimension_numbers=('NCHW', 'OIHW', 'NCHW'))

    def bn_relu(y, g, b):
        m = jnp.mean(y, axis=(0, 2, 3), keepdims=True)
        v = jnp.var(y, axis=(0, 2, 3), keepdims=True)   # biased, like PyTorch fwd
        y = (y - m) / jnp.sqrt(v + EPS) * g[None, :, None, None] + b[None, :, None, None]
        return jnp.maximum(y, 0.0)

    y = bn_relu(conv(x, w1), g1, b1)
    return bn_relu(conv(y, w2), g2, b2)


if __name__ == "__main__":
    N, Cin, H, W = 2, 4, 16, 16
    Cmid = Cout = 8                       # DoubleConv(4, 8) -> mid_channels = 8

    key = jax.random.PRNGKey(0)
    k = jax.random.split(key, 7)
    x = jax.random.normal(k[0], (N, Cin, H, W), jnp.float32)
    w1 = jax.random.normal(k[1], (Cmid, Cin, 3, 3), jnp.float32) * 0.2
    w2 = jax.random.normal(k[2], (Cout, Cmid, 3, 3), jnp.float32) * 0.2
    g1 = 1.0 + 0.1 * jax.random.normal(k[3], (Cmid,), jnp.float32)
    b1 = 0.1 * jax.random.normal(k[4], (Cmid,), jnp.float32)
    g2 = 1.0 + 0.1 * jax.random.normal(k[5], (Cout,), jnp.float32)
    b2 = 0.1 * jax.random.normal(k[6], (Cout,), jnp.float32)

    out = jax.block_until_ready(double_conv(x, w1, g1, b1, w2, g2, b2))
    ref = reference(x, w1, g1, b1, w2, g2, b2)

    assert out.shape == (N, Cout, H, W)
    max_err = float(jnp.max(jnp.abs(out - ref)))
    assert jnp.allclose(out, ref, atol=1e-3, rtol=1e-3), f"max_err={max_err}"
    print("KERNEL_OK")
</pallas_src>

<mosaic_0001>
module attributes {stable_mosaic.version = 11 : i64} {
  func.func @_conv1_stats_kernel(%arg0: i32, %arg1: memref<1x16x16x4xf32, #tpu.memory_space<vmem>>, %arg2: memref<36x8xf32, #tpu.memory_space<vmem>>, %arg3: memref<1x256x8xf32, #tpu.memory_space<vmem>>, %arg4: memref<1x2x8xf32, #tpu.memory_space<vmem>>, %arg5: memref<18x18x4xf32, #tpu.memory_space<vmem>>) attributes {dimension_semantics = [#tpu.dimension_semantics<parallel>], iteration_bounds = array<i64: 2>, scalar_prefetch = 0 : i64, scratch_operands = 1 : i64, tpu.core_type = #tpu.core_type<tc>, window_params = [{transform_indices = @transform_0, window_bounds = array<i64: 1, 16, 16, 4>}, {pipeline_mode = #tpu.pipeline_mode<synchronous>, transform_indices = @transform_1, window_bounds = array<i64: 36, 8>}, {transform_indices = @transform_2, window_bounds = array<i64: 1, 256, 8>}, {transform_indices = @transform_3, window_bounds = array<i64: 1, 2, 8>}]} {
    %cst = arith.constant 0.000000e+00 : f32
    %0 = vector.broadcast %cst : f32 to vector<1x18x4xf32>
    %c0 = arith.constant 0 : index
    %c0_0 = arith.constant 0 : index
    %c0_1 = arith.constant 0 : index
    %1 = vector.load %arg5[%c0, %c0_0, %c0_1] : memref<18x18x4xf32, #tpu.memory_space<vmem>>, vector<1x18x4xf32>
    tpu.vector_store %arg5[%c0, %c0_0, %c0_1], %0 {strides = array<i32>} : memref<18x18x4xf32, #tpu.memory_space<vmem>>, vector<1x18x4xf32>,
    %cst_2 = arith.constant 0.000000e+00 : f32
    %2 = vector.broadcast %cst_2 : f32 to vector<1x18x4xf32>
    %c17 = arith.constant 17 : index
    %c0_3 = arith.constant 0 : index
    %c0_4 = arith.constant 0 : index
    %3 = vector.load %arg5[%c17, %c0_3, %c0_4] : memref<18x18x4xf32, #tpu.memory_space<vmem>>, vector<1x18x4xf32>
    tpu.vector_store %arg5[%c17, %c0_3, %c0_4], %2 {strides = array<i32>} : memref<18x18x4xf32, #tpu.memory_space<vmem>>, vector<1x18x4xf32>,
    %cst_5 = arith.constant 0.000000e+00 : f32
    %4 = vector.broadcast %cst_5 : f32 to vector<18x1x4xf32>
    %c0_6 = arith.constant 0 : index
    %c0_7 = arith.constant 0 : index
    %c0_8 = arith.constant 0 : index
    %5 = vector.load %arg5[%c0_6, %c0_7, %c0_8] : memref<18x18x4xf32, #tpu.memory_space<vmem>>, vector<18x1x4xf32>
    tpu.vector_store %arg5[%c0_6, %c0_7, %c0_8], %4 {strides = array<i32>} : memref<18x18x4xf32, #tpu.memory_space<vmem>>, vector<18x1x4xf32>,
    %cst_9 = arith.constant 0.000000e+00 : f32
    %6 = vector.broadcast %cst_9 : f32 to vector<18x1x4xf32>
    %c0_10 = arith.constant 0 : index
    %c17_11 = arith.constant 17 : index
    %c0_12 = arith.constant 0 : index
    %7 = vector.load %arg5[%c0_10, %c17_11, %c0_12] : memref<18x18x4xf32, #tpu.memory_space<vmem>>, vector<18x1x4xf32>
    tpu.vector_store %arg5[%c0_10, %c17_11, %c0_12], %6 {strides = array<i32>} : memref<18x18x4xf32, #tpu.memory_space<vmem>>, vector<18x1x4xf32>,
    %c0_13 = arith.constant 0 : index
    %c0_14 = arith.constant 0 : index
    %c0_15 = arith.constant 0 : index
    %c0_16 = arith.constant 0 : index
    %8 = vector.load %arg1[%c0_13, %c0_14, %c0_15, %c0_16] : memref<1x16x16x4xf32, #tpu.memory_space<vmem>>, vector<1x16x16x4xf32>
    %9 = vector.shape_cast %8 : vector<1x16x16x4xf32> to vector<16x16x4xf32>
    %c1 = arith.constant 1 : index
    %c1_17 = arith.constant 1 : index
    %c0_18 = arith.constant 0 : index
    %10 = vector.load %arg5[%c1, %c1_17, %c0_18] : memref<18x18x4xf32, #tpu.memory_space<vmem>>, vector<16x16x4xf32>
    tpu.vector_store %arg5[%c1, %c1_17, %c0_18], %9 {strides = array<i32>} : memref<18x18x4xf32, #tpu.memory_space<vmem>>, vector<16x16x4xf32>,
    %c0_19 = arith.constant 0 : index
    %c0_20 = arith.constant 0 : index
    %c0_21 = arith.constant 0 : index
    %11 = vector.load %arg5[%c0_19, %c0_20, %c0_21] : memref<18x18x4xf32, #tpu.memory_space<vmem>>, vector<16x16x4xf32>
    %12 = vector.shape_cast %11 : vector<16x16x4xf32> to vector<256x4xf32>
    %c0_22 = arith.constant 0 : index
    %c1_23 = arith.constant 1 : index
    %c0_24 = arith.constant 0 : index
    %13 = vector.load %arg5[%c0_22, %c1_23, %c0_24] : memref<18x18x4xf32, #tpu.memory_space<vmem>>, vector<16x16x4xf32>
    %14 = vector.shape_cast %13 : vector<16x16x4xf32> to vector<256x4xf32>
    %c0_25 = arith.constant 0 : index
    %c2 = arith.constant 2 : index
    %c0_26 = arith.constant 0 : index
    %15 = vector.load %arg5[%c0_25, %c2, %c0_26] : memref<18x18x4xf32, #tpu.memory_space<vmem>>, vector<16x16x4xf32>
    %16 = vector.shape_cast %15 : vector<16x16x4xf32> to vector<256x4xf32>
    %c1_27 = arith.constant 1 : index
    %c0_28 = arith.constant 0 : index
    %c0_29 = arith.constant 0 : index
    %17 = vector.load %arg5[%c1_27, %c0_28, %c0_29] : memref<18x18x4xf32, #tpu.memory_space<vmem>>, vector<16x16x4xf32>
    %18 = vector.shape_cast %17 : vector<16x16x4xf32> to vector<256x4xf32>
    %c1_30 = arith.constant 1 : index
    %c1_31 = arith.constant 1 : index
    %c0_32 = arith.constant 0 : index
    %19 = vector.load %arg5[%c1_30, %c1_31, %c0_32] : memref<18x18x4xf32, #tpu.memory_space<vmem>>, vector<16x16x4xf32>
    %20 = vector.shape_cast %19 : vector<16x16x4xf32> to vector<256x4xf32>
    %c1_33 = arith.constant 1 : index
    %c2_34 = arith.constant 2 : index
    %c0_35 = arith.constant 0 : index
    %21 = vector.load %arg5[%c1_33, %c2_34, %c0_35] : memref<18x18x4xf32, #tpu.memory_space<vmem>>, vector<16x16x4xf32>
    %22 = vector.shape_cast %21 : vector<16x16x4xf32> to vector<256x4xf32>
    %c2_36 = arith.constant 2 : index
    %c0_37 = arith.constant 0 : index
    %c0_38 = arith.constant 0 : index
    %23 = vector.load %arg5[%c2_36, %c0_37, %c0_38] : memref<18x18x4xf32, #tpu.memory_space<vmem>>, vector<16x16x4xf32>
    %24 = vector.shape_cast %23 : vector<16x16x4xf32> to vector<256x4xf32>
    %c2_39 = arith.constant 2 : index
    %c1_40 = arith.constant 1 : index
    %c0_41 = arith.constant 0 : index
    %25 = vector.load %arg5[%c2_39, %c1_40, %c0_41] : memref<18x18x4xf32, #tpu.memory_space<vmem>>, vector<16x16x4xf32>
    %26 = vector.shape_cast %25 : vector<16x16x4xf32> to vector<256x4xf32>
    %c2_42 = arith.constant 2 : index
    %c2_43 = arith.constant 2 : index
    %c0_44 = arith.constant 0 : index
    %27 = vector.load %arg5[%c2_42, %c2_43, %c0_44] : memref<18x18x4xf32, #tpu.memory_space<vmem>>, vector<16x16x4xf32>
    %28 = vector.shape_cast %27 : vector<16x16x4xf32> to vector<256x4xf32>
    %29 = tpu.concatenate %12, %14, %16, %18, %20, %22, %24, %26, %28 in 1 : vector<256x4xf32>, vector<256x4xf32>, vector<256x4xf32>, vector<256x4xf32>, vector<256x4xf32>, vector<256x4xf32>, vector<256x4xf32>, vector<256x4xf32>, vector<256x4xf32> -> vector<256x36xf32>
    %c0_45 = arith.constant 0 : index
    %c0_46 = arith.constant 0 : index
    %30 = vector.load %arg2[%c0_45, %c0_46] : memref<36x8xf32, #tpu.memory_space<vmem>>, vector<36x8xf32>
    %cst_47 = arith.constant dense<0.000000e+00> : vector<256x8xf32>
    %31 = tpu.matmul %29, %30, %cst_47 {dimension_numbers = #tpu.dot_dimension_numbers<[1], [0], [0], [1], [0, 0, 1, 1], [], []>} : vector<256x36xf32>, vector<36x8xf32>, vector<256x8xf32> -> vector<256x8xf32>
    %cst_48 = arith.constant dense<0.000000e+00> : vector<8xf32>
    %32 = vector.multi_reduction <add>, %31, %cst_48 [0] : vector<256x8xf32> to vector<8xf32>
    %33 = vector.shape_cast %32 : vector<8xf32> to vector<1x8xf32>
    %34 = vector.shape_cast %33 : vector<1x8xf32> to vector<1x1x8xf32>
    %c0_49 = arith.constant 0 : index
    %c0_50 = arith.constant 0 : index
    %c0_51 = arith.constant 0 : index
    %35 = vector.load %arg4[%c0_49, %c0_50, %c0_51] : memref<1x2x8xf32, #tpu.memory_space<vmem>>, vector<1x1x8xf32>
    tpu.vector_store %arg4[%c0_49, %c0_50, %c0_51], %34 {strides = array<i32>} : memref<1x2x8xf32, #tpu.memory_space<vmem>>, vector<1x1x8xf32>,
    %36 = arith.mulf %31, %31 : vector<256x8xf32>
    %cst_52 = arith.constant dense<0.000000e+00> : vector<8xf32>
    %37 = vector.multi_reduction <add>, %36, %cst_52 [0] : vector<256x8xf32> to vector<8xf32>
    %38 = vector.shape_cast %37 : vector<8xf32> to vector<1x8xf32>
    %39 = vector.shape_cast %38 : vector<1x8xf32> to vector<1x1x8xf32>
    %c0_53 = arith.constant 0 : index
    %c1_54 = arith.constant 1 : index
    %c0_55 = arith.constant 0 : index
    %40 = vector.load %arg4[%c0_53, %c1_54, %c0_55] : memref<1x2x8xf32, #tpu.memory_space<vmem>>, vector<1x1x8xf32>
    tpu.vector_store %arg4[%c0_53, %c1_54, %c0_55], %39 {strides = array<i32>} : memref<1x2x8xf32, #tpu.memory_space<vmem>>, vector<1x1x8xf32>,
    %41 = vector.shape_cast %31 : vector<256x8xf32> to vector<1x256x8xf32>
    %c0_56 = arith.constant 0 : index
    %c0_57 = arith.constant 0 : index
    %c0_58 = arith.constant 0 : index
    %42 = vector.load %arg3[%c0_56, %c0_57, %c0_58] : memref<1x256x8xf32, #tpu.memory_space<vmem>>, vector<1x256x8xf32>
    tpu.vector_store %arg3[%c0_56, %c0_57, %c0_58], %41 {strides = array<i32>} : memref<1x256x8xf32, #tpu.memory_space<vmem>>, vector<1x256x8xf32>,
    return
  }
  func.func @transform_0(%arg0: i32) -> (i32, i32, i32, i32) {
    %c0_i32 = arith.constant 0 : i32
    %c0_i32_0 = arith.constant 0 : i32
    %c0_i32_1 = arith.constant 0 : i32
    %c0_i32_2 = arith.constant 0 : i32
    return %arg0, %c0_i32, %c0_i32_0, %c0_i32_1 : i32, i32, i32, i32
  }
  func.func @transform_1(%arg0: i32) -> (i32, i32) {
    %c0_i32 = arith.constant 0 : i32
    %c0_i32_0 = arith.constant 0 : i32
    %c0_i32_1 = arith.constant 0 : i32
    return %c0_i32, %c0_i32_0 : i32, i32
  }
  func.func @transform_2(%arg0: i32) -> (i32, i32, i32) {
    %c0_i32 = arith.constant 0 : i32
    %c0_i32_0 = arith.constant 0 : i32
    %c0_i32_1 = arith.constant 0 : i32
    return %arg0, %c0_i32, %c0_i32_0 : i32, i32, i32
  }
  func.func @transform_3(%arg0: i32) -> (i32, i32, i32) {
    %c0_i32 = arith.constant 0 : i32
    %c0_i32_0 = arith.constant 0 : i32
    %c0_i32_1 = arith.constant 0 : i32
    return %arg0, %c0_i32, %c0_i32_0 : i32, i32, i32
  }
}

</mosaic_0001>

<llo_original>
// kernel: tpu_custom_call.1
$region0: #{tpu_custom_call.1}
  #allocation0 [shape = 'u32[]', space=smem, size = 0x4, offset = 0x4, fixed_abs, tag = 'smem constant byte address 0x4 - core index']
  #allocation1 [shape = 'u32[144,128]{1,0:T(1,128)}', space=vmem, size = 0x12000, scoped, tag = 'internal scratch']
  #allocation2 [shape = 'f32[18,18,4]{2,1,0:T(8,128)}', space=vmem, size = 0x36000, scoped, tag = 'scratch operand']
  %s0 = inlined_call_operand.vmem [shape: f32[2,16,16,4], index: 0, kind: input, shape index: {}]
  %s1 = inlined_call_operand.vmem [shape: f32[36,8], index: 1, kind: input, shape index: {}]
  %s2 = inlined_call_operand.vmem [shape: f32[2,256,8], index: 2, kind: output, shape index: {0}]
  %s3 = inlined_call_operand.hbm [shape: f32[2,2,8], index: 3, kind: output, shape index: {1}]
  %4 = xla_tuple %s2, %s3
  %s5 = sld [smem:[#allocation0]]
  $region49: #{tpu_custom_call.1} parent=0
    _
  %s7 = ssub.s32 1, %s5
  %s8 = scalar_select 0, %s7, %s5
  $region1: #{tpu_custom_call.1} parent=0
    #allocation3 [shape = 'u8[2048]{0}', space=vmem, size = 0x800, scoped, tag = 'output window, operand 1']
    #allocation4 [shape = 's32[2]{0}', space=sflag, size = 0x8, scoped, tag = 'scoped memory for tpu_custom_call.1']
    %9 = vsyncpa [#allocation4], 0
    %s10 = scalar_lea.sflag [#allocation4], 1
    %11 = vsyncpa %s10, 0
    loop: start=0, step=1, limit=4
    $region2: #{tpu_custom_call.1} parent=1 // loop_pre_header
      _
    $region3: #{tpu_custom_call.1} parent=1 // loop_header
      %s13 = sphi 0, %s17
      %p14 = scmp.ge.s32.totalorder %s13, 4
      %s23 = sphi 0, %s25
      %s26 = sphi 0, %s23
      %s27 = sphi 0, %s26
      %s43 = sphi 0, %s27
      %s47 = sphi 0, %s47
      %s49 = sphi 0, %s47
      %s50 = sphi 0, %s49
      %s64 = sphi 0, %s50
      %s70 = sphi 0, %s72
      %s73 = sphi 0, %s70
      %s74 = sphi 0, %s73
      %s90 = sphi 0, %s74
      %s96 = sphi 0, %s98
      %s99 = sphi 0, %s96
      %s100 = sphi 0, %s99
      %s116 = sphi 0, %s100
    $region4: #{tpu_custom_call.1} parent=1 // loop_header_branch
      %16 = sbr.rel (%p14) target = $region8
    $region5: #{tpu_custom_call.1} parent=1 // loop_body
      %s18 = ssub.s32 %s13, 1
      %s19 = ssub.s32 %s13, 2
      %s20 = sadd.s32 %s13, 1
      %s21 = ssub.s32 %s13, %s20
      %p22 = scmp.eq.s32.totalorder %s21, 0
      %s24 = sadd.s32 %s23, 1
      %s25 = scalar_select %p22, %s23, %s24
      %p28 = pneg %p22
      %p29 = scmp.eq.s32.totalorder %s13, 1
      %p30 = por %p28, %p29
      %p31 = scmp.ne.s32.totalorder %s23, %s26
      %p32 = scmp.eq.s32.totalorder %s13, 0
      %p33 = por %p31, %p32
      %p34 = scmp.ne.s32.totalorder %s23, %s26
      %p35 = scmp.eq.s32.totalorder %s18, 1
      %p36 = por %p34, %p35
      %p37 = scmp.ne.s32.totalorder %s26, %s27
      %p38 = scmp.eq.s32.totalorder %s18, 0
      %p39 = por %p37, %p38
      %p40 = scmp.ne.s32.totalorder %s26, %s27
      %p41 = scmp.eq.s32.totalorder %s19, 1
      %p42 = por %p40, %p41
      %p44 = scmp.ne.s32.totalorder %s27, %s43
      %p45 = scmp.eq.s32.totalorder %s19, 0
      %p46 = por %p44, %p45
      %s48 = sadd.s32 %s47, 1
      %p51 = scmp.eq.s32.totalorder %s13, 1
      %p52 = scmp.ne.s32.totalorder %s47, %s49
      %p53 = scmp.eq.s32.totalorder %s13, 0
      %p54 = por %p52, %p53
      %p55 = scmp.ne.s32.totalorder %s47, %s49
      %p56 = scmp.eq.s32.totalorder %s18, 1
      %p57 = por %p55, %p56
      %p58 = scmp.ne.s32.totalorder %s49, %s50
      %p59 = scmp.eq.s32.totalorder %s18, 0
      %p60 = por %p58, %p59
      %p61 = scmp.ne.s32.totalorder %s49, %s50
      %p62 = scmp.eq.s32.totalorder %s19, 1
      %p63 = por %p61, %p62
      %p65 = scmp.ne.s32.totalorder %s50, %s64
      %p66 = scmp.eq.s32.totalorder %s19, 0
      %p67 = por %p65, %p66
      %s68 = ssub.s32 %s13, %s20
      %p69 = scmp.eq.s32.totalorder %s68, 0
      %s71 = sadd.s32 %s70, 1
      %s72 = scalar_select %p69, %s70, %s71
      %p75 = pneg %p69
      %p76 = scmp.eq.s32.totalorder %s13, 1
      %p77 = por %p75, %p76
      %p78 = scmp.ne.s32.totalorder %s70, %s73
      %p79 = scmp.eq.s32.totalorder %s13, 0
      %p80 = por %p78, %p79
      %p81 = scmp.ne.s32.totalorder %s70, %s73
      %p82 = scmp.eq.s32.totalorder %s18, 1
      %p83 = por %p81, %p82
      %p84 = scmp.ne.s32.totalorder %s73, %s74
      %p85 = scmp.eq.s32.totalorder %s18, 0
      %p86 = por %p84, %p85
      %p87 = scmp.ne.s32.totalorder %s73, %s74
      %p88 = scmp.eq.s32.totalorder %s19, 1
      %p89 = por %p87, %p88
      %p91 = scmp.ne.s32.totalorder %s74, %s90
      %p92 = scmp.eq.s32.totalorder %s19, 0
      %p93 = por %p91, %p92
      %s94 = ssub.s32 %s13, %s20
      %p95 = scmp.eq.s32.totalorder %s94, 0
      %s97 = sadd.s32 %s96, 1
      %s98 = scalar_select %p95, %s96, %s97
      %p101 = pneg %p95
      %p102 = scmp.eq.s32.totalorder %s13, 1
      %p103 = por %p101, %p102
      %p104 = scmp.ne.s32.totalorder %s96, %s99
      %p105 = scmp.eq.s32.totalorder %s13, 0
      %p106 = por %p104, %p105
      %p107 = scmp.ne.s32.totalorder %s96, %s99
      %p108 = scmp.eq.s32.totalorder %s18, 1
      %p109 = por %p107, %p108
      %p110 = scmp.ne.s32.totalorder %s99, %s100
      %p111 = scmp.eq.s32.totalorder %s18, 0
      %p112 = por %p110, %p111
      %p113 = scmp.ne.s32.totalorder %s99, %s100
      %p114 = scmp.eq.s32.totalorder %s19, 1
      %p115 = por %p113, %p114
      %p117 = scmp.ne.s32.totalorder %s100, %s116
      %p118 = scmp.eq.s32.totalorder %s19, 0
      %p119 = por %p117, %p118
      %p120 = scmp.le.s32.totalorder 1, %s13
      %p121 = scmp.lt.s32.totalorder %s13, 3
      %p122 = pnand %p120, %p121
      %p123 = pneg %p122
      // Predicated region
      $region9: #{tpu_custom_call.1} parent=5 // pred_check
        _
      $region10: #{tpu_custom_call.1} parent=5 // pred_check_branch
        %125 = sbr.rel (%p122) target = $region12
      $region11: #{tpu_custom_call.1} parent=5 // pred_region
        %s126 = ssub.s32 %s13, 1
        // Predicated region
        $region13: #{tpu_custom_call.1} parent=11 // pred_check
          %p127 = pneg %p60
        $region14: #{tpu_custom_call.1} parent=11 // pred_check_branch
          %129 = sbr.rel (%p127) target = $region16
        $region15: #{tpu_custom_call.1} parent=11 // pred_region
          _
        $region16: #{tpu_custom_call.1} parent=11 // pred_fallthru
          _
      $region12: #{tpu_custom_call.1} parent=5 // pred_fallthru
        _
      %p130 = scmp.lt.s32.totalorder %s13, 2
      // Predicated region
      $region17: #{tpu_custom_call.1} parent=5 // pred_check
        %p131 = pneg %p130
      $region18: #{tpu_custom_call.1} parent=5 // pred_check_branch
        %133 = sbr.rel (%p131) target = $region20
      $region19: #{tpu_custom_call.1} parent=5 // pred_region
        // Predicated region
        $region21: #{tpu_custom_call.1} parent=19 // pred_check
          %p134 = pneg %p33
        $region22: #{tpu_custom_call.1} parent=19 // pred_check_branch
          %136 = sbr.rel (%p134) target = $region24
        $region23: #{tpu_custom_call.1} parent=19 // pred_region
          %p137 = scmp.lt.s32.totalorder %s13, 1
          %s138 = scalar_select %p137, %s13, 1
          %s139 = smul.addr %s138, 32
          %s140 = smul.addr %s139, 8
          %s141 = scalar_lea.vmem %s0, %s140
        $region24: #{tpu_custom_call.1} parent=19 // pred_fallthru
          _
      $region20: #{tpu_custom_call.1} parent=5 // pred_fallthru
        _
      %p142 = scmp.le.s32.totalorder 1, %s13
      %p143 = scmp.lt.s32.totalorder %s13, 3
      %p144 = pnand %p142, %p143
      %p145 = pneg %p144
      // Predicated region
      $region25: #{tpu_custom_call.1} parent=5 // pred_check
        _
      $region26: #{tpu_custom_call.1} parent=5 // pred_check_branch
        %147 = sbr.rel (%p144) target = $region28
      $region27: #{tpu_custom_call.1} parent=5 // pred_region
        %s148 = ssub.s32 %s13, 1
        %p149 = scmp.lt.s32.totalorder %s18, 1
        %s150 = scalar_select %p149, %s18, 1
        %s151 = smul.addr %s150, 32
        %s152 = smul.addr %s151, 8
        %s153 = scalar_lea.vmem %s0, %s152
        %p154 = pneg %p39
        %p155 = pneg %p36
        %p156 = pneg %p60
        %p157 = pneg %p57
        %p158 = pneg %p86
        %p159 = pneg %p83
        %p160 = scmp.lt.s32.totalorder %s18, 1
        %s161 = scalar_select %p160, %s18, 1
        %s162 = smul.addr %s161, 32
        %s163 = smul.addr %s162, 8
        %s164 = scalar_lea.vmem %s2, %s163
        %p165 = pneg %p112
        %p166 = pneg %p109
        %s167 = sand.u32 %s99, 1
        %s168 = scalar_lea.sflag [#allocation4], %s167
        %s169 = sand.u32 %s99, 1
        %s170 = smul.addr %s169, 2
        %s171 = scalar_lea.vmem [#allocation3], %s170
        %p172 = scmp.lt.s32.totalorder %s18, 1
        %s173 = scalar_select %p172, %s18, 1
        %s174 = smul.addr %s173, 32
        %s175 = smul.addr %s174, 8
        %s176 = scalar_lea.vmem %s0, %s175
        %p177 = scmp.lt.s32.totalorder %s18, 1
        %s178 = scalar_select %p177, %s18, 1
        %s179 = smul.addr %s178, 32
        %s180 = smul.addr %s179, 8
        %s181 = scalar_lea.vmem %s2, %s180
        %vm182 = vcmask 31744
        %183 = vst.msk [vmem:[#allocation2] sm:$0xff] %vm182, 0.0
        %184 = vst.msk [vmem:[#allocation2 + $0x8] sm:$0xff] %vm182, 0.0
        %vm185 = vcmask 25600
        %186 = vst.msk [vmem:[#allocation2 + $0x10] sm:$0x3] %vm185, 0.0
        %s187 = scalar_lea.vmem [#allocation2], 408
        %188 = vst.msk [vmem:[%s187] sm:$0xff] %vm182, 0.0
        %189 = vst.msk [vmem:[%s187 + $0x8] sm:$0xff] %vm182, 0.0
        %190 = vst.msk [vmem:[%s187 + $0x10] sm:$0x3] %vm185, 0.0
        %vm191 = vcmask 24576
        %192 = vst.msk [vmem:[#allocation2] sm:$0x1] %vm191, 0.0
        %193 = vst.msk [vmem:[#allocation2 + $0x18] sm:$0x1] %vm191, 0.0
        %194 = vst.msk [vmem:[#allocation2 + $0x30] sm:$0x1] %vm191, 0.0
        %195 = vst.msk [vmem:[#allocation2 + $0x48] sm:$0x1] %vm191, 0.0
        %196 = vst.msk [vmem:[#allocation2 + $0x60] sm:$0x1] %vm191, 0.0
        %197 = vst.msk [vmem:[#allocation2 + $0x78] sm:$0x1] %vm191, 0.0
        %198 = vst.msk [vmem:[#allocation2 + $0x90] sm:$0x1] %vm191, 0.0
        %199 = vst.msk [vmem:[#allocation2 + $0xa8] sm:$0x1] %vm191, 0.0
        %200 = vst.msk [vmem:[#allocation2 + $0xc0] sm:$0x1] %vm191, 0.0
        %201 = vst.msk [vmem:[#allocation2 + $0xd8] sm:$0x1] %vm191, 0.0
        %202 = vst.msk [vmem:[#allocation2 + $0xf0] sm:$0x1] %vm191, 0.0
        %203 = vst.msk [vmem:[#allocation2 + $0x108] sm:$0x1] %vm191, 0.0
        %204 = vst.msk [vmem:[#allocation2 + $0x120] sm:$0x1] %vm191, 0.0
        %205 = vst.msk [vmem:[#allocation2 + $0x138] sm:$0x1] %vm191, 0.0
        %206 = vst.msk [vmem:[#allocation2 + $0x150] sm:$0x1] %vm191, 0.0
        %207 = vst.msk [vmem:[#allocation2 + $0x168] sm:$0x1] %vm191, 0.0
        %208 = vst.msk [vmem:[#allocation2 + $0x180] sm:$0x1] %vm191, 0.0
        %209 = vst.msk [vmem:[#allocation2 + $0x198] sm:$0x1] %vm191, 0.0
        %210 = vst.msk [vmem:[#allocation2 + $0x11] sm:$0x1] %vm191, 0.0
        %211 = vst.msk [vmem:[#allocation2 + $0x29] sm:$0x1] %vm191, 0.0
        %212 = vst.msk [vmem:[#allocation2 + $0x41] sm:$0x1] %vm191, 0.0
        %213 = vst.msk [vmem:[#allocation2 + $0x59] sm:$0x1] %vm191, 0.0
        %214 = vst.msk [vmem:[#allocation2 + $0x71] sm:$0x1] %vm191, 0.0
        %215 = vst.msk [vmem:[#allocation2 + $0x89] sm:$0x1] %vm191, 0.0
        %216 = vst.msk [vmem:[#allocation2 + $0xa1] sm:$0x1] %vm191, 0.0
        %217 = vst.msk [vmem:[#allocation2 + $0xb9] sm:$0x1] %vm191, 0.0
        %218 = vst.msk [vmem:[#allocation2 + $0xd1] sm:$0x1] %vm191, 0.0
        %219 = vst.msk [vmem:[#allocation2 + $0xe9] sm:$0x1] %vm191, 0.0
        %220 = vst.msk [vmem:[#allocation2 + $0x101] sm:$0x1] %vm191, 0.0
        %221 = vst.msk [vmem:[#allocation2 + $0x119] sm:$0x1] %vm191, 0.0
        %222 = vst.msk [vmem:[#allocation2 + $0x131] sm:$0x1] %vm191, 0.0
        %223 = vst.msk [vmem:[#allocation2 + $0x149] sm:$0x1] %vm191, 0.0
        %224 = vst.msk [vmem:[#allocation2 + $0x161] sm:$0x1] %vm191, 0.0
        %225 = vst.msk [vmem:[#allocation2 + $0x179] sm:$0x1] %vm191, 0.0
        %226 = vst.msk [vmem:[#allocation2 + $0x191] sm:$0x1] %vm191, 0.0
        %227 = vst.msk [vmem:[#allocation2 + $0x1a9] sm:$0x1] %vm191, 0.0
        %v228 = vld [vmem:[%s176] sm:$0xff]
        %v229 = vld [vmem:[%s176 + $0x8] sm:$0xff]
        %v230 = vld [vmem:[%s176 + $0x10] sm:$0xff]
        %v231 = vld [vmem:[%s176 + $0x18] sm:$0xff]
        %v232 = vld [vmem:[%s176 + $0x20] sm:$0xff]
        %v233 = vld [vmem:[%s176 + $0x28] sm:$0xff]
        %v234 = vld [vmem:[%s176 + $0x30] sm:$0xff]
        %v235 = vld [vmem:[%s176 + $0x38] sm:$0xff]
        %v236 = vld [vmem:[%s176 + $0x40] sm:$0xff]
        %v237 = vld [vmem:[%s176 + $0x48] sm:$0xff]
        %v238 = vld [vmem:[%s176 + $0x50] sm:$0xff]
        %v239 = vld [vmem:[%s176 + $0x58] sm:$0xff]
        %v240 = vld [vmem:[%s176 + $0x60] sm:$0xff]
        %v241 = vld [vmem:[%s176 + $0x68] sm:$0xff]
        %v242 = vld [vmem:[%s176 + $0x70] sm:$0xff]
        %v243 = vld [vmem:[%s176 + $0x78] sm:$0xff]
        %v244 = vld [vmem:[%s176 + $0x80] sm:$0xff]
        %v245 = vld [vmem:[%s176 + $0x88] sm:$0xff]
        %v246 = vld [vmem:[%s176 + $0x90] sm:$0xff]
        %v247 = vld [vmem:[%s176 + $0x98] sm:$0xff]
        %v248 = vld [vmem:[%s176 + $0xa0] sm:$0xff]
        %v249 = vld [vmem:[%s176 + $0xa8] sm:$0xff]
        %v250 = vld [vmem:[%s176 + $0xb0] sm:$0xff]
        %v251 = vld [vmem:[%s176 + $0xb8] sm:$0xff]
        %v252 = vld [vmem:[%s176 + $0xc0] sm:$0xff]
        %v253 = vld [vmem:[%s176 + $0xc8] sm:$0xff]
        %v254 = vld [vmem:[%s176 + $0xd0] sm:$0xff]
        %v255 = vld [vmem:[%s176 + $0xd8] sm:$0xff]
        %v256 = vld [vmem:[%s176 + $0xe0] sm:$0xff]
        %v257 = vld [vmem:[%s176 + $0xe8] sm:$0xff]
        %v258 = vld [vmem:[%s176 + $0xf0] sm:$0xff]
        %v259 = vld [vmem:[%s176 + $0xf8] sm:$0xff]
        %s260 = scalar_lea.vmem [#allocation2], 24
        %261 = vst.msk [vmem:[%s260 + $0x1] sm:$0xff] %vm182, %v228
        %262 = vst.msk [vmem:[%s260 + $0x9] sm:$0xff] %vm182, %v229
        %263 = vst.msk [vmem:[%s260 + $0x19] sm:$0xff] %vm182, %v230
        %264 = vst.msk [vmem:[%s260 + $0x21] sm:$0xff] %vm182, %v231
        %265 = vst.msk [vmem:[%s260 + $0x31] sm:$0xff] %vm182, %v232
        %266 = vst.msk [vmem:[%s260 + $0x39] sm:$0xff] %vm182, %v233
        %267 = vst.msk [vmem:[%s260 + $0x49] sm:$0xff] %vm182, %v234
        %268 = vst.msk [vmem:[%s260 + $0x51] sm:$0xff] %vm182, %v235
        %269 = vst.msk [vmem:[%s260 + $0x61] sm:$0xff] %vm182, %v236
        %270 = vst.msk [vmem:[%s260 + $0x69] sm:$0xff] %vm182, %v237
        %271 = vst.msk [vmem:[%s260 + $0x79] sm:$0xff] %vm182, %v238
        %272 = vst.msk [vmem:[%s260 + $0x81] sm:$0xff] %vm182, %v239
        %273 = vst.msk [vmem:[%s260 + $0x91] sm:$0xff] %vm182, %v240
        %274 = vst.msk [vmem:[%s260 + $0x99] sm:$0xff] %vm182, %v241
        %275 = vst.msk [vmem:[%s260 + $0xa9] sm:$0xff] %vm182, %v242
        %276 = vst.msk [vmem:[%s260 + $0xb1] sm:$0xff] %vm182, %v243
        %277 = vst.msk [vmem:[%s260 + $0xc1] sm:$0xff] %vm182, %v244
        %278 = vst.msk [vmem:[%s260 + $0xc9] sm:$0xff] %vm182, %v245
        %279 = vst.msk [vmem:[%s260 + $0xd9] sm:$0xff] %vm182, %v246
        %280 = vst.msk [vmem:[%s260 + $0xe1] sm:$0xff] %vm182, %v247
        %281 = vst.msk [vmem:[%s260 + $0xf1] sm:$0xff] %vm182, %v248
        %282 = vst.msk [vmem:[%s260 + $0xf9] sm:$0xff] %vm182, %v249
        %283 = vst.msk [vmem:[%s260 + $0x109] sm:$0xff] %vm182, %v250
        %284 = vst.msk [vmem:[%s260 + $0x111] sm:$0xff] %vm182, %v251
        %285 = vst.msk [vmem:[%s260 + $0x121] sm:$0xff] %vm182, %v252
        %286 = vst.msk [vmem:[%s260 + $0x129] sm:$0xff] %vm182, %v253
        %287 = vst.msk [vmem:[%s260 + $0x139] sm:$0xff] %vm182, %v254
        %288 = vst.msk [vmem:[%s260 + $0x141] sm:$0xff] %vm182, %v255
        %289 = vst.msk [vmem:[%s260 + $0x151] sm:$0xff] %vm182, %v256
        %290 = vst.msk [vmem:[%s260 + $0x159] sm:$0xff] %vm182, %v257
        %291 = vst.msk [vmem:[%s260 + $0x169] sm:$0xff] %vm182, %v258
        %292 = vst.msk [vmem:[%s260 + $0x171] sm:$0xff] %vm182, %v259
        %v293 = vld [vmem:[#allocation2] sm:$0xff]
        %v294 = vld [vmem:[#allocation2 + $0x8] sm:$0xff]
        %v295 = vld [vmem:[#allocation2 + $0x18] sm:$0xff]
        %v296 = vld [vmem:[#allocation2 + $0x20] sm:$0xff]
        %v297 = vld [vmem:[#allocation2 + $0x30] sm:$0xff]
        %v298 = vld [vmem:[#allocation2 + $0x38] sm:$0xff]
        %v299 = vld [vmem:[#allocation2 + $0x48] sm:$0xff]
        %v300 = vld [vmem:[#allocation2 + $0x50] sm:$0xff]
        %v301 = vld [vmem:[#allocation2 + $0x60] sm:$0xff]
        %v302 = vld [vmem:[#allocation2 + $0x68] sm:$0xff]
        %v303 = vld [vmem:[#allocation2 + $0x78] sm:$0xff]
        %v304 = vld [vmem:[#allocation2 + $0x80] sm:$0xff]
        %v305 = vld [vmem:[#allocation2 + $0x90] sm:$0xff]
        %v306 = vld [vmem:[#allocation2 + $0x98] sm:$0xff]
        %v307 = vld [vmem:[#allocation2 + $0xa8] sm:$0xff]
        %v308 = vld [vmem:[#allocation2 + $0xb0] sm:$0xff]
        %v309 = vld [vmem:[#allocation2 + $0xc0] sm:$0xff]
        %v310 = vld [vmem:[#allocation2 + $0xc8] sm:$0xff]
        %v311 = vld [vmem:[#allocation2 + $0xd8] sm:$0xff]
        %v312 = vld [vmem:[#allocation2 + $0xe0] sm:$0xff]
        %v313 = vld [vmem:[#allocation2 + $0xf0] sm:$0xff]
        %v314 = vld [vmem:[#allocation2 + $0xf8] sm:$0xff]
        %v315 = vld [vmem:[#allocation2 + $0x108] sm:$0xff]
        %v316 = vld [vmem:[#allocation2 + $0x110] sm:$0xff]
        %v317 = vld [vmem:[#allocation2 + $0x120] sm:$0xff]
        %v318 = vld [vmem:[#allocation2 + $0x128] sm:$0xff]
        %v319 = vld [vmem:[#allocation2 + $0x138] sm:$0xff]
        %v320 = vld [vmem:[#allocation2 + $0x140] sm:$0xff]
        %v321 = vld [vmem:[#allocation2 + $0x150] sm:$0xff]
        %v322 = vld [vmem:[#allocation2 + $0x158] sm:$0xff]
        %v323 = vld [vmem:[#allocation2 + $0x168] sm:$0xff]
        %v324 = vld [vmem:[#allocation2 + $0x170] sm:$0xff]
        %v325 = vld [vmem:[#allocation2 + $0x1] sm:$0xff]
        %v326 = vld [vmem:[#allocation2 + $0x9] sm:$0xff]
        %v327 = vld [vmem:[#allocation2 + $0x19] sm:$0xff]
        %v328 = vld [vmem:[#allocation2 + $0x21] sm:$0xff]
        %v329 = vld [vmem:[#allocation2 + $0x31] sm:$0xff]
        %v330 = vld [vmem:[#allocation2 + $0x39] sm:$0xff]
        %v331 = vld [vmem:[#allocation2 + $0x49] sm:$0xff]
        %v332 = vld [vmem:[#allocation2 + $0x51] sm:$0xff]
        %v333 = vld [vmem:[#allocation2 + $0x61] sm:$0xff]
        %v334 = vld [vmem:[#allocation2 + $0x69] sm:$0xff]
        %v335 = vld [vmem:[#allocation2 + $0x79] sm:$0xff]
        %v336 = vld [vmem:[#allocation2 + $0x81] sm:$0xff]
        %v337 = vld [vmem:[#allocation2 + $0x91] sm:$0xff]
        %v338 = vld [vmem:[#allocation2 + $0x99] sm:$0xff]
        %v339 = vld [vmem:[#allocation2 + $0xa9] sm:$0xff]
        %v340 = vld [vmem:[#allocation2 + $0xb1] sm:$0xff]
        %v341 = vld [vmem:[#allocation2 + $0xc1] sm:$0xff]
        %v342 = vld [vmem:[#allocation2 + $0xc9] sm:$0xff]
        %v343 = vld [vmem:[#allocation2 + $0xd9] sm:$0xff]
        %v344 = vld [vmem:[#allocation2 + $0xe1] sm:$0xff]
        %v345 = vld [vmem:[#allocation2 + $0xf1] sm:$0xff]
        %v346 = vld [vmem:[#allocation2 + $0xf9] sm:$0xff]
        %v347 = vld [vmem:[#allocation2 + $0x109] sm:$0xff]
        %v348 = vld [vmem:[#allocation2 + $0x111] sm:$0xff]
        %v349 = vld [vmem:[#allocation2 + $0x121] sm:$0xff]
        %v350 = vld [vmem:[#allocation2 + $0x129] sm:$0xff]
        %v351 = vld [vmem:[#allocation2 + $0x139] sm:$0xff]
        %v352 = vld [vmem:[#allocation2 + $0x141] sm:$0xff]
        %v353 = vld [vmem:[#allocation2 + $0x151] sm:$0xff]
        %v354 = vld [vmem:[#allocation2 + $0x159] sm:$0xff]
        %v355 = vld [vmem:[#allocation2 + $0x169] sm:$0xff]
        %v356 = vld [vmem:[#allocation2 + $0x171] sm:$0xff]
        %v357 = vld [vmem:[#allocation2 + $0x2] sm:$0xff]
        %v358 = vld [vmem:[#allocation2 + $0xa] sm:$0xff]
        %v359 = vld [vmem:[#allocation2 + $0x1a] sm:$0xff]
        %v360 = vld [vmem:[#allocation2 + $0x22] sm:$0xff]
        %v361 = vld [vmem:[#allocation2 + $0x32] sm:$0xff]
        %v362 = vld [vmem:[#allocation2 + $0x3a] sm:$0xff]
        %v363 = vld [vmem:[#allocation2 + $0x4a] sm:$0xff]
        %v364 = vld [vmem:[#allocation2 + $0x52] sm:$0xff]
        %v365 = vld [vmem:[#allocation2 + $0x62] sm:$0xff]
        %v366 = vld [vmem:[#allocation2 + $0x6a] sm:$0xff]
        %v367 = vld [vmem:[#allocation2 + $0x7a] sm:$0xff]
        %v368 = vld [vmem:[#allocation2 + $0x82] sm:$0xff]
        %v369 = vld [vmem:[#allocation2 + $0x92] sm:$0xff]
        %v370 = vld [vmem:[#allocation2 + $0x9a] sm:$0xff]
        %v371 = vld [vmem:[#allocation2 + $0xaa] sm:$0xff]
        %v372 = vld [vmem:[#allocation2 + $0xb2] sm:$0xff]
        %v373 = vld [vmem:[#allocation2 + $0xc2] sm:$0xff]
        %v374 = vld [vmem:[#allocation2 + $0xca] sm:$0xff]
        %v375 = vld [vmem:[#allocation2 + $0xda] sm:$0xff]
        %v376 = vld [vmem:[#allocation2 + $0xe2] sm:$0xff]
        %v377 = vld [vmem:[#allocation2 + $0xf2] sm:$0xff]
        %v378 = vld [vmem:[#allocation2 + $0xfa] sm:$0xff]
        %v379 = vld [vmem:[#allocation2 + $0x10a] sm:$0xff]
        %v380 = vld [vmem:[#allocation2 + $0x112] sm:$0xff]
        %v381 = vld [vmem:[#allocation2 + $0x122] sm:$0xff]
        %v382 = vld [vmem:[#allocation2 + $0x12a] sm:$0xff]
        %v383 = vld [vmem:[#allocation2 + $0x13a] sm:$0xff]
        %v384 = vld [vmem:[#allocation2 + $0x142] sm:$0xff]
        %v385 = vld [vmem:[#allocation2 + $0x152] sm:$0xff]
        %v386 = vld [vmem:[#allocation2 + $0x15a] sm:$0xff]
        %v387 = vld [vmem:[#allocation2 + $0x16a] sm:$0xff]
        %v388 = vld [vmem:[#allocation2 + $0x172] sm:$0xff]
        %v389 = vld [vmem:[%s260] sm:$0xff]
        %v390 = vld [vmem:[%s260 + $0x8] sm:$0xff]
        %v391 = vld [vmem:[%s260 + $0x18] sm:$0xff]
        %v392 = vld [vmem:[%s260 + $0x20] sm:$0xff]
        %v393 = vld [vmem:[%s260 + $0x30] sm:$0xff]
        %v394 = vld [vmem:[%s260 + $0x38] sm:$0xff]
        %v395 = vld [vmem:[%s260 + $0x48] sm:$0xff]
        %v396 = vld [vmem:[%s260 + $0x50] sm:$0xff]
        %v397 = vld [vmem:[%s260 + $0x60] sm:$0xff]
        %v398 = vld [vmem:[%s260 + $0x68] sm:$0xff]
        %v399 = vld [vmem:[%s260 + $0x78] sm:$0xff]
        %v400 = vld [vmem:[%s260 + $0x80] sm:$0xff]
        %v401 = vld [vmem:[%s260 + $0x90] sm:$0xff]
        %v402 = vld [vmem:[%s260 + $0x98] sm:$0xff]
        %v403 = vld [vmem:[%s260 + $0xa8] sm:$0xff]
        %v404 = vld [vmem:[%s260 + $0xb0] sm:$0xff]
        %v405 = vld [vmem:[%s260 + $0xc0] sm:$0xff]
        %v406 = vld [vmem:[%s260 + $0xc8] sm:$0xff]
        %v407 = vld [vmem:[%s260 + $0xd8] sm:$0xff]
        %v408 = vld [vmem:[%s260 + $0xe0] sm:$0xff]
        %v409 = vld [vmem:[%s260 + $0xf0] sm:$0xff]
        %v410 = vld [vmem:[%s260 + $0xf8] sm:$0xff]
        %v411 = vld [vmem:[%s260 + $0x108] sm:$0xff]
        %v412 = vld [vmem:[%s260 + $0x110] sm:$0xff]
        %v413 = vld [vmem:[%s260 + $0x120] sm:$0xff]
        %v414 = vld [vmem:[%s260 + $0x128] sm:$0xff]
        %v415 = vld [vmem:[%s260 + $0x138] sm:$0xff]
        %v416 = vld [vmem:[%s260 + $0x140] sm:$0xff]
        %v417 = vld [vmem:[%s260 + $0x150] sm:$0xff]
        %v418 = vld [vmem:[%s260 + $0x158] sm:$0xff]
        %v419 = vld [vmem:[%s260 + $0x168] sm:$0xff]
        %v420 = vld [vmem:[%s260 + $0x170] sm:$0xff]
        %v421 = vld [vmem:[%s260 + $0x1] sm:$0xff]
        %v422 = vld [vmem:[%s260 + $0x9] sm:$0xff]
        %v423 = vld [vmem:[%s260 + $0x19] sm:$0xff]
        %v424 = vld [vmem:[%s260 + $0x21] sm:$0xff]
        %v425 = vld [vmem:[%s260 + $0x31] sm:$0xff]
        %v426 = vld [vmem:[%s260 + $0x39] sm:$0xff]
        %v427 = vld [vmem:[%s260 + $0x49] sm:$0xff]
        %v428 = vld [vmem:[%s260 + $0x51] sm:$0xff]
        %v429 = vld [vmem:[%s260 + $0x61] sm:$0xff]
        %v430 = vld [vmem:[%s260 + $0x69] sm:$0xff]
        %v431 = vld [vmem:[%s260 + $0x79] sm:$0xff]
        %v432 = vld [vmem:[%s260 + $0x81] sm:$0xff]
        %v433 = vld [vmem:[%s260 + $0x91] sm:$0xff]
        %v434 = vld [vmem:[%s260 + $0x99] sm:$0xff]
        %v435 = vld [vmem:[%s260 + $0xa9] sm:$0xff]
        %v436 = vld [vmem:[%s260 + $0xb1] sm:$0xff]
        %v437 = vld [vmem:[%s260 + $0xc1] sm:$0xff]
        %v438 = vld [vmem:[%s260 + $0xc9] sm:$0xff]
        %v439 = vld [vmem:[%s260 + $0xd9] sm:$0xff]
        %v440 = vld [vmem:[%s260 + $0xe1] sm:$0xff]
        %v441 = vld [vmem:[%s260 + $0xf1] sm:$0xff]
        %v442 = vld [vmem:[%s260 + $0xf9] sm:$0xff]
        %v443 = vld [vmem:[%s260 + $0x109] sm:$0xff]
        %v444 = vld [vmem:[%s260 + $0x111] sm:$0xff]
        %v445 = vld [vmem:[%s260 + $0x121] sm:$0xff]
        %v446 = vld [vmem:[%s260 + $0x129] sm:$0xff]
        %v447 = vld [vmem:[%s260 + $0x139] sm:$0xff]
        %v448 = vld [vmem:[%s260 + $0x141] sm:$0xff]
        %v449 = vld [vmem:[%s260 + $0x151] sm:$0xff]
        %v450 = vld [vmem:[%s260 + $0x159] sm:$0xff]
        %v451 = vld [vmem:[%s260 + $0x169] sm:$0xff]
        %v452 = vld [vmem:[%s260 + $0x171] sm:$0xff]
        %v453 = vld [vmem:[%s260 + $0x2] sm:$0xff]
        %v454 = vld [vmem:[%s260 + $0xa] sm:$0xff]
        %v455 = vld [vmem:[%s260 + $0x1a] sm:$0xff]
        %v456 = vld [vmem:[%s260 + $0x22] sm:$0xff]
        %v457 = vld [vmem:[%s260 + $0x32] sm:$0xff]
        %v458 = vld [vmem:[%s260 + $0x3a] sm:$0xff]
        %v459 = vld [vmem:[%s260 + $0x4a] sm:$0xff]
        %v460 = vld [vmem:[%s260 + $0x52] sm:$0xff]
        %v461 = vld [vmem:[%s260 + $0x62] sm:$0xff]
        %v462 = vld [vmem:[%s260 + $0x6a] sm:$0xff]
        %v463 = vld [vmem:[%s260 + $0x7a] sm:$0xff]
        %v464 = vld [vmem:[%s260 + $0x82] sm:$0xff]
        %v465 = vld [vmem:[%s260 + $0x92] sm:$0xff]
        %v466 = vld [vmem:[%s260 + $0x9a] sm:$0xff]
        %v467 = vld [vmem:[%s260 + $0xaa] sm:$0xff]
        %v468 = vld [vmem:[%s260 + $0xb2] sm:$0xff]
        %v469 = vld [vmem:[%s260 + $0xc2] sm:$0xff]
        %v470 = vld [vmem:[%s260 + $0xca] sm:$0xff]
        %v471 = vld [vmem:[%s260 + $0xda] sm:$0xff]
        %v472 = vld [vmem:[%s260 + $0xe2] sm:$0xff]
        %v473 = vld [vmem:[%s260 + $0xf2] sm:$0xff]
        %v474 = vld [vmem:[%s260 + $0xfa] sm:$0xff]
        %v475 = vld [vmem:[%s260 + $0x10a] sm:$0xff]
        %v476 = vld [vmem:[%s260 + $0x112] sm:$0xff]
        %v477 = vld [vmem:[%s260 + $0x122] sm:$0xff]
        %v478 = vld [vmem:[%s260 + $0x12a] sm:$0xff]
        %v479 = vld [vmem:[%s260 + $0x13a] sm:$0xff]
        %v480 = vld [vmem:[%s260 + $0x142] sm:$0xff]
        %v481 = vld [vmem:[%s260 + $0x152] sm:$0xff]
        %v482 = vld [vmem:[%s260 + $0x15a] sm:$0xff]
        %v483 = vld [vmem:[%s260 + $0x16a] sm:$0xff]
        %v484 = vld [vmem:[%s260 + $0x172] sm:$0xff]
        %s485 = scalar_lea.vmem [#allocation2], 48
        %v486 = vld [vmem:[%s485] sm:$0xff]
        %v487 = vld [vmem:[%s485 + $0x8] sm:$0xff]
        %v488 = vld [vmem:[%s485 + $0x18] sm:$0xff]
        %v489 = vld [vmem:[%s485 + $0x20] sm:$0xff]
        %v490 = vld [vmem:[%s485 + $0x30] sm:$0xff]
        %v491 = vld [vmem:[%s485 + $0x38] sm:$0xff]
        %v492 = vld [vmem:[%s485 + $0x48] sm:$0xff]
        %v493 = vld [vmem:[%s485 + $0x50] sm:$0xff]
        %v494 = vld [vmem:[%s485 + $0x60] sm:$0xff]
        %v495 = vld [vmem:[%s485 + $0x68] sm:$0xff]
        %v496 = vld [vmem:[%s485 + $0x78] sm:$0xff]
        %v497 = vld [vmem:[%s485 + $0x80] sm:$0xff]
        %v498 = vld [vmem:[%s485 + $0x90] sm:$0xff]
        %v499 = vld [vmem:[%s485 + $0x98] sm:$0xff]
        %v500 = vld [vmem:[%s485 + $0xa8] sm:$0xff]
        %v501 = vld [vmem:[%s485 + $0xb0] sm:$0xff]
        %v502 = vld [vmem:[%s485 + $0xc0] sm:$0xff]
        %v503 = vld [vmem:[%s485 + $0xc8] sm:$0xff]
        %v504 = vld [vmem:[%s485 + $0xd8] sm:$0xff]
        %v505 = vld [vmem:[%s485 + $0xe0] sm:$0xff]
        %v506 = vld [vmem:[%s485 + $0xf0] sm:$0xff]
        %v507 = vld [vmem:[%s485 + $0xf8] sm:$0xff]
        %v508 = vld [vmem:[%s485 + $0x108] sm:$0xff]
        %v509 = vld [vmem:[%s485 + $0x110] sm:$0xff]
        %v510 = vld [vmem:[%s485 + $0x120] sm:$0xff]
        %v511 = vld [vmem:[%s485 + $0x128] sm:$0xff]
        %v512 = vld [vmem:[%s485 + $0x138] sm:$0xff]
        %v513 = vld [vmem:[%s485 + $0x140] sm:$0xff]
        %v514 = vld [vmem:[%s485 + $0x150] sm:$0xff]
        %v515 = vld [vmem:[%s485 + $0x158] sm:$0xff]
        %v516 = vld [vmem:[%s485 + $0x168] sm:$0xff]
        %v517 = vld [vmem:[%s485 + $0x170] sm:$0xff]
        %v518 = vld [vmem:[%s485 + $0x1] sm:$0xff]
        %v519 = vld [vmem:[%s485 + $0x9] sm:$0xff]
        %v520 = vld [vmem:[%s485 + $0x19] sm:$0xff]
        %v521 = vld [vmem:[%s485 + $0x21] sm:$0xff]
        %v522 = vld [vmem:[%s485 + $0x31] sm:$0xff]
        %v523 = vld [vmem:[%s485 + $0x39] sm:$0xff]
        %v524 = vld [vmem:[%s485 + $0x49] sm:$0xff]
        %v525 = vld [vmem:[%s485 + $0x51] sm:$0xff]
        %v526 = vld [vmem:[%s485 + $0x61] sm:$0xff]
        %v527 = vld [vmem:[%s485 + $0x69] sm:$0xff]
        %v528 = vld [vmem:[%s485 + $0x79] sm:$0xff]
        %v529 = vld [vmem:[%s485 + $0x81] sm:$0xff]
        %v530 = vld [vmem:[%s485 + $0x91] sm:$0xff]
        %v531 = vld [vmem:[%s485 + $0x99] sm:$0xff]
        %v532 = vld [vmem:[%s485 + $0xa9] sm:$0xff]
        %v533 = vld [vmem:[%s485 + $0xb1] sm:$0xff]
        %v534 = vld [vmem:[%s485 + $0xc1] sm:$0xff]
        %v535 = vld [vmem:[%s485 + $0xc9] sm:$0xff]
        %v536 = vld [vmem:[%s485 + $0xd9] sm:$0xff]
        %v537 = vld [vmem:[%s485 + $0xe1] sm:$0xff]
        %v538 = vld [vmem:[%s485 + $0xf1] sm:$0xff]
        %v539 = vld [vmem:[%s485 + $0xf9] sm:$0xff]
        %v540 = vld [vmem:[%s485 + $0x109] sm:$0xff]
        %v541 = vld [vmem:[%s485 + $0x111] sm:$0xff]
        %v542 = vld [vmem:[%s485 + $0x121] sm:$0xff]
        %v543 = vld [vmem:[%s485 + $0x129] sm:$0xff]
        %v544 = vld [vmem:[%s485 + $0x139] sm:$0xff]
        %v545 = vld [vmem:[%s485 + $0x141] sm:$0xff]
        %v546 = vld [vmem:[%s485 + $0x151] sm:$0xff]
        %v547 = vld [vmem:[%s485 + $0x159] sm:$0xff]
        %v548 = vld [vmem:[%s485 + $0x169] sm:$0xff]
        %v549 = vld [vmem:[%s485 + $0x171] sm:$0xff]
        %v550 = vld [vmem:[%s485 + $0x2] sm:$0xff]
        %v551 = vld [vmem:[%s485 + $0xa] sm:$0xff]
        %v552 = vld [vmem:[%s485 + $0x1a] sm:$0xff]
        %v553 = vld [vmem:[%s485 + $0x22] sm:$0xff]
        %v554 = vld [vmem:[%s485 + $0x32] sm:$0xff]
        %v555 = vld [vmem:[%s485 + $0x3a] sm:$0xff]
        %v556 = vld [vmem:[%s485 + $0x4a] sm:$0xff]
        %v557 = vld [vmem:[%s485 + $0x52] sm:$0xff]
        %v558 = vld [vmem:[%s485 + $0x62] sm:$0xff]
        %v559 = vld [vmem:[%s485 + $0x6a] sm:$0xff]
        %v560 = vld [vmem:[%s485 + $0x7a] sm:$0xff]
        %v561 = vld [vmem:[%s485 + $0x82] sm:$0xff]
        %v562 = vld [vmem:[%s485 + $0x92] sm:$0xff]
        %v563 = vld [vmem:[%s485 + $0x9a] sm:$0xff]
        %v564 = vld [vmem:[%s485 + $0xaa] sm:$0xff]
        %v565 = vld [vmem:[%s485 + $0xb2] sm:$0xff]
        %v566 = vld [vmem:[%s485 + $0xc2] sm:$0xff]
        %v567 = vld [vmem:[%s485 + $0xca] sm:$0xff]
        %v568 = vld [vmem:[%s485 + $0xda] sm:$0xff]
        %v569 = vld [vmem:[%s485 + $0xe2] sm:$0xff]
        %v570 = vld [vmem:[%s485 + $0xf2] sm:$0xff]
        %v571 = vld [vmem:[%s485 + $0xfa] sm:$0xff]
        %v572 = vld [vmem:[%s485 + $0x10a] sm:$0xff]
        %v573 = vld [vmem:[%s485 + $0x112] sm:$0xff]
        %v574 = vld [vmem:[%s485 + $0x122] sm:$0xff]
        %v575 = vld [vmem:[%s485 + $0x12a] sm:$0xff]
        %v576 = vld [vmem:[%s485 + $0x13a] sm:$0xff]
        %v577 = vld [vmem:[%s485 + $0x142] sm:$0xff]
        %v578 = vld [vmem:[%s485 + $0x152] sm:$0xff]
        %v579 = vld [vmem:[%s485 + $0x15a] sm:$0xff]
        %v580 = vld [vmem:[%s485 + $0x16a] sm:$0xff]
        %v581 = vld [vmem:[%s485 + $0x172] sm:$0xff]
        %614 = vrot.lane.b32.xlu0 %v325, 4
        %v615 = vpop.permute.xlu0 %614
        %616 = vrot.lane.b32.xlu0 %v326, 4
        %v617 = vpop.permute.xlu0 %616
        %618 = vrot.lane.b32.xlu0 %v327, 4
        %v619 = vpop.permute.xlu0 %618
        %620 = vrot.lane.b32.xlu0 %v328, 4
        %v621 = vpop.permute.xlu0 %620
        %622 = vrot.lane.b32.xlu0 %v329, 4
        %v623 = vpop.permute.xlu0 %622
        %624 = vrot.lane.b32.xlu0 %v330, 4
        %v625 = vpop.permute.xlu0 %624
        %626 = vrot.lane.b32.xlu0 %v331, 4
        %v627 = vpop.permute.xlu0 %626
        %628 = vrot.lane.b32.xlu0 %v332, 4
        %v629 = vpop.permute.xlu0 %628
        %630 = vrot.lane.b32.xlu0 %v333, 4
        %v631 = vpop.permute.xlu0 %630
        %632 = vrot.lane.b32.xlu0 %v334, 4
        %v633 = vpop.permute.xlu0 %632
        %634 = vrot.lane.b32.xlu0 %v335, 4
        %v635 = vpop.permute.xlu0 %634
        %636 = vrot.lane.b32.xlu0 %v336, 4
        %v637 = vpop.permute.xlu0 %636
        %638 = vrot.lane.b32.xlu0 %v337, 4
        %v639 = vpop.permute.xlu0 %638
        %640 = vrot.lane.b32.xlu0 %v338, 4
        %v641 = vpop.permute.xlu0 %640
        %642 = vrot.lane.b32.xlu0 %v339, 4
        %v643 = vpop.permute.xlu0 %642
        %644 = vrot.lane.b32.xlu0 %v340, 4
        %v645 = vpop.permute.xlu0 %644
        %646 = vrot.lane.b32.xlu0 %v341, 4
        %v647 = vpop.permute.xlu0 %646
        %648 = vrot.lane.b32.xlu0 %v342, 4
        %v649 = vpop.permute.xlu0 %648
        %650 = vrot.lane.b32.xlu0 %v343, 4
        %v651 = vpop.permute.xlu0 %650
        %652 = vrot.lane.b32.xlu0 %v344, 4
        %v653 = vpop.permute.xlu0 %652
        %654 = vrot.lane.b32.xlu0 %v345, 4
        %v655 = vpop.permute.xlu0 %654
        %656 = vrot.lane.b32.xlu0 %v346, 4
        %v657 = vpop.permute.xlu0 %656
        %658 = vrot.lane.b32.xlu0 %v347, 4
        %v659 = vpop.permute.xlu0 %658
        %660 = vrot.lane.b32.xlu0 %v348, 4
        %v661 = vpop.permute.xlu0 %660
        %662 = vrot.lane.b32.xlu0 %v349, 4
        %v663 = vpop.permute.xlu0 %662
        %664 = vrot.lane.b32.xlu0 %v350, 4
        %v665 = vpop.permute.xlu0 %664
        %666 = vrot.lane.b32.xlu0 %v351, 4
        %v667 = vpop.permute.xlu0 %666
        %668 = vrot.lane.b32.xlu0 %v352, 4
        %v669 = vpop.permute.xlu0 %668
        %670 = vrot.lane.b32.xlu0 %v353, 4
        %v671 = vpop.permute.xlu0 %670
        %672 = vrot.lane.b32.xlu0 %v354, 4
        %v673 = vpop.permute.xlu0 %672
        %674 = vrot.lane.b32.xlu0 %v355, 4
        %v675 = vpop.permute.xlu0 %674
        %676 = vrot.lane.b32.xlu0 %v356, 4
        %v677 = vpop.permute.xlu0 %676
        %742 = vrot.lane.b32.xlu0 %v357, 8
        %v743 = vpop.permute.xlu0 %742
        %744 = vrot.lane.b32.xlu0 %v358, 8
        %v745 = vpop.permute.xlu0 %744
        %746 = vrot.lane.b32.xlu0 %v359, 8
        %v747 = vpop.permute.xlu0 %746
        %748 = vrot.lane.b32.xlu0 %v360, 8
        %v749 = vpop.permute.xlu0 %748
        %750 = vrot.lane.b32.xlu0 %v361, 8
        %v751 = vpop.permute.xlu0 %750
        %752 = vrot.lane.b32.xlu0 %v362, 8
        %v753 = vpop.permute.xlu0 %752
        %754 = vrot.lane.b32.xlu0 %v363, 8
        %v755 = vpop.permute.xlu0 %754
        %756 = vrot.lane.b32.xlu0 %v364, 8
        %v757 = vpop.permute.xlu0 %756
        %758 = vrot.lane.b32.xlu0 %v365, 8
        %v759 = vpop.permute.xlu0 %758
        %760 = vrot.lane.b32.xlu0 %v366, 8
        %v761 = vpop.permute.xlu0 %760
        %762 = vrot.lane.b32.xlu0 %v367, 8
        %v763 = vpop.permute.xlu0 %762
        %764 = vrot.lane.b32.xlu0 %v368, 8
        %v765 = vpop.permute.xlu0 %764
        %766 = vrot.lane.b32.xlu0 %v369, 8
        %v767 = vpop.permute.xlu0 %766
        %768 = vrot.lane.b32.xlu0 %v370, 8
        %v769 = vpop.permute.xlu0 %768
        %770 = vrot.lane.b32.xlu0 %v371, 8
        %v771 = vpop.permute.xlu0 %770
        %772 = vrot.lane.b32.xlu0 %v372, 8
        %v773 = vpop.permute.xlu0 %772
        %774 = vrot.lane.b32.xlu0 %v373, 8
        %v775 = vpop.permute.xlu0 %774
        %776 = vrot.lane.b32.xlu0 %v374, 8
        %v777 = vpop.permute.xlu0 %776
        %778 = vrot.lane.b32.xlu0 %v375, 8
        %v779 = vpop.permute.xlu0 %778
        %780 = vrot.lane.b32.xlu0 %v376, 8
        %v781 = vpop.permute.xlu0 %780
        %782 = vrot.lane.b32.xlu0 %v377, 8
        %v783 = vpop.permute.xlu0 %782
        %784 = vrot.lane.b32.xlu0 %v378, 8
        %v785 = vpop.permute.xlu0 %784
        %786 = vrot.lane.b32.xlu0 %v379, 8
        %v787 = vpop.permute.xlu0 %786
        %788 = vrot.lane.b32.xlu0 %v380, 8
        %v789 = vpop.permute.xlu0 %788
        %790 = vrot.lane.b32.xlu0 %v381, 8
        %v791 = vpop.permute.xlu0 %790
        %792 = vrot.lane.b32.xlu0 %v382, 8
        %v793 = vpop.permute.xlu0 %792
        %794 = vrot.lane.b32.xlu0 %v383, 8
        %v795 = vpop.permute.xlu0 %794
        %796 = vrot.lane.b32.xlu0 %v384, 8
        %v797 = vpop.permute.xlu0 %796
        %798 = vrot.lane.b32.xlu0 %v385, 8
        %v799 = vpop.permute.xlu0 %798
        %800 = vrot.lane.b32.xlu0 %v386, 8
        %v801 = vpop.permute.xlu0 %800
        %802 = vrot.lane.b32.xlu0 %v387, 8
        %v803 = vpop.permute.xlu0 %802
        %804 = vrot.lane.b32.xlu0 %v388, 8
        %v805 = vpop.permute.xlu0 %804
        %870 = vrot.lane.b32.xlu0 %v389, 12
        %v871 = vpop.permute.xlu0 %870
        %872 = vrot.lane.b32.xlu0 %v390, 12
        %v873 = vpop.permute.xlu0 %872
        %874 = vrot.lane.b32.xlu0 %v391, 12
        %v875 = vpop.permute.xlu0 %874
        %876 = vrot.lane.b32.xlu0 %v392, 12
        %v877 = vpop.permute.xlu0 %876
        %878 = vrot.lane.b32.xlu0 %v393, 12
        %v879 = vpop.permute.xlu0 %878
        %880 = vrot.lane.b32.xlu0 %v394, 12
        %v881 = vpop.permute.xlu0 %880
        %882 = vrot.lane.b32.xlu0 %v395, 12
        %v883 = vpop.permute.xlu0 %882
        %884 = vrot.lane.b32.xlu0 %v396, 12
        %v885 = vpop.permute.xlu0 %884
        %886 = vrot.lane.b32.xlu0 %v397, 12
        %v887 = vpop.permute.xlu0 %886
        %888 = vrot.lane.b32.xlu0 %v398, 12
        %v889 = vpop.permute.xlu0 %888
        %890 = vrot.lane.b32.xlu0 %v399, 12
        %v891 = vpop.permute.xlu0 %890
        %892 = vrot.lane.b32.xlu0 %v400, 12
        %v893 = vpop.permute.xlu0 %892
        %894 = vrot.lane.b32.xlu0 %v401, 12
        %v895 = vpop.permute.xlu0 %894
        %896 = vrot.lane.b32.xlu0 %v402, 12
        %v897 = vpop.permute.xlu0 %896
        %898 = vrot.lane.b32.xlu0 %v403, 12
        %v899 = vpop.permute.xlu0 %898
        %900 = vrot.lane.b32.xlu0 %v404, 12
        %v901 = vpop.permute.xlu0 %900
        %902 = vrot.lane.b32.xlu0 %v405, 12
        %v903 = vpop.permute.xlu0 %902
        %904 = vrot.lane.b32.xlu0 %v406, 12
        %v905 = vpop.permute.xlu0 %904
        %906 = vrot.lane.b32.xlu0 %v407, 12
        %v907 = vpop.permute.xlu0 %906
        %908 = vrot.lane.b32.xlu0 %v408, 12
        %v909 = vpop.permute.xlu0 %908
        %910 = vrot.lane.b32.xlu0 %v409, 12
        %v911 = vpop.permute.xlu0 %910
        %912 = vrot.lane.b32.xlu0 %v410, 12
        %v913 = vpop.permute.xlu0 %912
        %914 = vrot.lane.b32.xlu0 %v411, 12
        %v915 = vpop.permute.xlu0 %914
        %916 = vrot.lane.b32.xlu0 %v412, 12
        %v917 = vpop.permute.xlu0 %916
        %918 = vrot.lane.b32.xlu0 %v413, 12
        %v919 = vpop.permute.xlu0 %918
        %920 = vrot.lane.b32.xlu0 %v414, 12
        %v921 = vpop.permute.xlu0 %920
        %922 = vrot.lane.b32.xlu0 %v415, 12
        %v923 = vpop.permute.xlu0 %922
        %924 = vrot.lane.b32.xlu0 %v416, 12
        %v925 = vpop.permute.xlu0 %924
        %926 = vrot.lane.b32.xlu0 %v417, 12
        %v927 = vpop.permute.xlu0 %926
        %928 = vrot.lane.b32.xlu0 %v418, 12
        %v929 = vpop.permute.xlu0 %928
        %930 = vrot.lane.b32.xlu0 %v419, 12
        %v931 = vpop.permute.xlu0 %930
        %932 = vrot.lane.b32.xlu0 %v420, 12
        %v933 = vpop.permute.xlu0 %932
        %998 = vrot.lane.b32.xlu0 %v421, 16
        %v999 = vpop.permute.xlu0 %998
        %1000 = vrot.lane.b32.xlu0 %v422, 16
        %v1001 = vpop.permute.xlu0 %1000
        %1002 = vrot.lane.b32.xlu0 %v423, 16
        %v1003 = vpop.permute.xlu0 %1002
        %1004 = vrot.lane.b32.xlu0 %v424, 16
        %v1005 = vpop.permute.xlu0 %1004
        %1006 = vrot.lane.b32.xlu0 %v425, 16
        %v1007 = vpop.permute.xlu0 %1006
        %1008 = vrot.lane.b32.xlu0 %v426, 16
        %v1009 = vpop.permute.xlu0 %1008
        %1010 = vrot.lane.b32.xlu0 %v427, 16
        %v1011 = vpop.permute.xlu0 %1010
        %1012 = vrot.lane.b32.xlu0 %v428, 16
        %v1013 = vpop.permute.xlu0 %1012
        %1014 = vrot.lane.b32.xlu0 %v429, 16
        %v1015 = vpop.permute.xlu0 %1014
        %1016 = vrot.lane.b32.xlu0 %v430, 16
        %v1017 = vpop.permute.xlu0 %1016
        %1018 = vrot.lane.b32.xlu0 %v431, 16
        %v1019 = vpop.permute.xlu0 %1018
        %1020 = vrot.lane.b32.xlu0 %v432, 16
        %v1021 = vpop.permute.xlu0 %1020
        %1022 = vrot.lane.b32.xlu0 %v433, 16
        %v1023 = vpop.permute.xlu0 %1022
        %1024 = vrot.lane.b32.xlu0 %v434, 16
        %v1025 = vpop.permute.xlu0 %1024
        %1026 = vrot.lane.b32.xlu0 %v435, 16
        %v1027 = vpop.permute.xlu0 %1026
        %1028 = vrot.lane.b32.xlu0 %v436, 16
        %v1029 = vpop.permute.xlu0 %1028
        %1030 = vrot.lane.b32.xlu0 %v437, 16
        %v1031 = vpop.permute.xlu0 %1030
        %1032 = vrot.lane.b32.xlu0 %v438, 16
        %v1033 = vpop.permute.xlu0 %1032
        %1034 = vrot.lane.b32.xlu0 %v439, 16
        %v1035 = vpop.permute.xlu0 %1034
        %1036 = vrot.lane.b32.xlu0 %v440, 16
        %v1037 = vpop.permute.xlu0 %1036
        %1038 = vrot.lane.b32.xlu0 %v441, 16
        %v1039 = vpop.permute.xlu0 %1038
        %1040 = vrot.lane.b32.xlu0 %v442, 16
        %v1041 = vpop.permute.xlu0 %1040
        %1042 = vrot.lane.b32.xlu0 %v443, 16
        %v1043 = vpop.permute.xlu0 %1042
        %1044 = vrot.lane.b32.xlu0 %v444, 16
        %v1045 = vpop.permute.xlu0 %1044
        %1046 = vrot.lane.b32.xlu0 %v445, 16
        %v1047 = vpop.permute.xlu0 %1046
        %1048 = vrot.lane.b32.xlu0 %v446, 16
        %v1049 = vpop.permute.xlu0 %1048
        %1050 = vrot.lane.b32.xlu0 %v447, 16
        %v1051 = vpop.permute.xlu0 %1050
        %1052 = vrot.lane.b32.xlu0 %v448, 16
        %v1053 = vpop.permute.xlu0 %1052
        %1054 = vrot.lane.b32.xlu0 %v449, 16
        %v1055 = vpop.permute.xlu0 %1054
        %1056 = vrot.lane.b32.xlu0 %v450, 16
        %v1057 = vpop.permute.xlu0 %1056
        %1058 = vrot.lane.b32.xlu0 %v451, 16
        %v1059 = vpop.permute.xlu0 %1058
        %1060 = vrot.lane.b32.xlu0 %v452, 16
        %v1061 = vpop.permute.xlu0 %1060
        %1126 = vrot.lane.b32.xlu0 %v453, 20
        %v1127 = vpop.permute.xlu0 %1126
        %1128 = vrot.lane.b32.xlu0 %v454, 20
        %v1129 = vpop.permute.xlu0 %1128
        %1130 = vrot.lane.b32.xlu0 %v455, 20
        %v1131 = vpop.permute.xlu0 %1130
        %1132 = vrot.lane.b32.xlu0 %v456, 20
        %v1133 = vpop.permute.xlu0 %1132
        %1134 = vrot.lane.b32.xlu0 %v457, 20
        %v1135 = vpop.permute.xlu0 %1134
        %1136 = vrot.lane.b32.xlu0 %v458, 20
        %v1137 = vpop.permute.xlu0 %1136
        %1138 = vrot.lane.b32.xlu0 %v459, 20
        %v1139 = vpop.permute.xlu0 %1138
        %1140 = vrot.lane.b32.xlu0 %v460, 20
        %v1141 = vpop.permute.xlu0 %1140
        %1142 = vrot.lane.b32.xlu0 %v461, 20
        %v1143 = vpop.permute.xlu0 %1142
        %1144 = vrot.lane.b32.xlu0 %v462, 20
        %v1145 = vpop.permute.xlu0 %1144
        %1146 = vrot.lane.b32.xlu0 %v463, 20
        %v1147 = vpop.permute.xlu0 %1146
        %1148 = vrot.lane.b32.xlu0 %v464, 20
        %v1149 = vpop.permute.xlu0 %1148
        %1150 = vrot.lane.b32.xlu0 %v465, 20
        %v1151 = vpop.permute.xlu0 %1150
        %1152 = vrot.lane.b32.xlu0 %v466, 20
        %v1153 = vpop.permute.xlu0 %1152
        %1154 = vrot.lane.b32.xlu0 %v467, 20
        %v1155 = vpop.permute.xlu0 %1154
        %1156 = vrot.lane.b32.xlu0 %v468, 20
        %v1157 = vpop.permute.xlu0 %1156
        %1158 = vrot.lane.b32.xlu0 %v469, 20
        %v1159 = vpop.permute.xlu0 %1158
        %1160 = vrot.lane.b32.xlu0 %v470, 20
        %v1161 = vpop.permute.xlu0 %1160
        %1162 = vrot.lane.b32.xlu0 %v471, 20
        %v1163 = vpop.permute.xlu0 %1162
        %1164 = vrot.lane.b32.xlu0 %v472, 20
        %v1165 = vpop.permute.xlu0 %1164
        %1166 = vrot.lane.b32.xlu0 %v473, 20
        %v1167 = vpop.permute.xlu0 %1166
        %1168 = vrot.lane.b32.xlu0 %v474, 20
        %v1169 = vpop.permute.xlu0 %1168
        %1170 = vrot.lane.b32.xlu0 %v475, 20
        %v1171 = vpop.permute.xlu0 %1170
        %1172 = vrot.lane.b32.xlu0 %v476, 20
        %v1173 = vpop.permute.xlu0 %1172
        %1174 = vrot.lane.b32.xlu0 %v477, 20
        %v1175 = vpop.permute.xlu0 %1174
        %1176 = vrot.lane.b32.xlu0 %v478, 20
        %v1177 = vpop.permute.xlu0 %1176
        %1178 = vrot.lane.b32.xlu0 %v479, 20
        %v1179 = vpop.permute.xlu0 %1178
        %1180 = vrot.lane.b32.xlu0 %v480, 20
        %v1181 = vpop.permute.xlu0 %1180
        %1182 = vrot.lane.b32.xlu0 %v481, 20
        %v1183 = vpop.permute.xlu0 %1182
        %1184 = vrot.lane.b32.xlu0 %v482, 20
        %v1185 = vpop.permute.xlu0 %1184
        %1186 = vrot.lane.b32.xlu0 %v483, 20
        %v1187 = vpop.permute.xlu0 %1186
        %1188 = vrot.lane.b32.xlu0 %v484, 20
        %v1189 = vpop.permute.xlu0 %1188
        %1254 = vrot.lane.b32.xlu0 %v486, 24
        %v1255 = vpop.permute.xlu0 %1254
        %1256 = vrot.lane.b32.xlu0 %v487, 24
        %v1257 = vpop.permute.xlu0 %1256
        %1258 = vrot.lane.b32.xlu0 %v488, 24
        %v1259 = vpop.permute.xlu0 %1258
        %1260 = vrot.lane.b32.xlu0 %v489, 24
        %v1261 = vpop.permute.xlu0 %1260
        %1262 = vrot.lane.b32.xlu0 %v490, 24
        %v1263 = vpop.permute.xlu0 %1262
        %1264 = vrot.lane.b32.xlu0 %v491, 24
        %v1265 = vpop.permute.xlu0 %1264
        %1266 = vrot.lane.b32.xlu0 %v492, 24
        %v1267 = vpop.permute.xlu0 %1266
        %1268 = vrot.lane.b32.xlu0 %v493, 24
        %v1269 = vpop.permute.xlu0 %1268
        %1270 = vrot.lane.b32.xlu0 %v494, 24
        %v1271 = vpop.permute.xlu0 %1270
        %1272 = vrot.lane.b32.xlu0 %v495, 24
        %v1273 = vpop.permute.xlu0 %1272
        %1274 = vrot.lane.b32.xlu0 %v496, 24
        %v1275 = vpop.permute.xlu0 %1274
        %1276 = vrot.lane.b32.xlu0 %v497, 24
        %v1277 = vpop.permute.xlu0 %1276
        %1278 = vrot.lane.b32.xlu0 %v498, 24
        %v1279 = vpop.permute.xlu0 %1278
        %1280 = vrot.lane.b32.xlu0 %v499, 24
        %v1281 = vpop.permute.xlu0 %1280
        %1282 = vrot.lane.b32.xlu0 %v500, 24
        %v1283 = vpop.permute.xlu0 %1282
        %1284 = vrot.lane.b32.xlu0 %v501, 24
        %v1285 = vpop.permute.xlu0 %1284
        %1286 = vrot.lane.b32.xlu0 %v502, 24
        %v1287 = vpop.permute.xlu0 %1286
        %1288 = vrot.lane.b32.xlu0 %v503, 24
        %v1289 = vpop.permute.xlu0 %1288
        %1290 = vrot.lane.b32.xlu0 %v504, 24
        %v1291 = vpop.permute.xlu0 %1290
        %1292 = vrot.lane.b32.xlu0 %v505, 24
        %v1293 = vpop.permute.xlu0 %1292
        %1294 = vrot.lane.b32.xlu0 %v506, 24
        %v1295 = vpop.permute.xlu0 %1294
        %1296 = vrot.lane.b32.xlu0 %v507, 24
        %v1297 = vpop.permute.xlu0 %1296
        %1298 = vrot.lane.b32.xlu0 %v508, 24
        %v1299 = vpop.permute.xlu0 %1298
        %1300 = vrot.lane.b32.xlu0 %v509, 24
        %v1301 = vpop.permute.xlu0 %1300
        %1302 = vrot.lane.b32.xlu0 %v510, 24
        %v1303 = vpop.permute.xlu0 %1302
        %1304 = vrot.lane.b32.xlu0 %v511, 24
        %v1305 = vpop.permute.xlu0 %1304
        %1306 = vrot.lane.b32.xlu0 %v512, 24
        %v1307 = vpop.permute.xlu0 %1306
        %1308 = vrot.lane.b32.xlu0 %v513, 24
        %v1309 = vpop.permute.xlu0 %1308
        %1310 = vrot.lane.b32.xlu0 %v514, 24
        %v1311 = vpop.permute.xlu0 %1310
        %1312 = vrot.lane.b32.xlu0 %v515, 24
        %v1313 = vpop.permute.xlu0 %1312
        %1314 = vrot.lane.b32.xlu0 %v516, 24
        %v1315 = vpop.permute.xlu0 %1314
        %1316 = vrot.lane.b32.xlu0 %v517, 24
        %v1317 = vpop.permute.xlu0 %1316
        %1382 = vrot.lane.b32.xlu0 %v518, 28
        %v1383 = vpop.permute.xlu0 %1382
        %1384 = vrot.lane.b32.xlu0 %v519, 28
        %v1385 = vpop.permute.xlu0 %1384
        %1386 = vrot.lane.b32.xlu0 %v520, 28
        %v1387 = vpop.permute.xlu0 %1386
        %1388 = vrot.lane.b32.xlu0 %v521, 28
        %v1389 = vpop.permute.xlu0 %1388
        %1390 = vrot.lane.b32.xlu0 %v522, 28
        %v1391 = vpop.permute.xlu0 %1390
        %1392 = vrot.lane.b32.xlu0 %v523, 28
        %v1393 = vpop.permute.xlu0 %1392
        %1394 = vrot.lane.b32.xlu0 %v524, 28
        %v1395 = vpop.permute.xlu0 %1394
        %1396 = vrot.lane.b32.xlu0 %v525, 28
        %v1397 = vpop.permute.xlu0 %1396
        %1398 = vrot.lane.b32.xlu0 %v526, 28
        %v1399 = vpop.permute.xlu0 %1398
        %1400 = vrot.lane.b32.xlu0 %v527, 28
        %v1401 = vpop.permute.xlu0 %1400
        %1402 = vrot.lane.b32.xlu0 %v528, 28
        %v1403 = vpop.permute.xlu0 %1402
        %1404 = vrot.lane.b32.xlu0 %v529, 28
        %v1405 = vpop.permute.xlu0 %1404
        %1406 = vrot.lane.b32.xlu0 %v530, 28
        %v1407 = vpop.permute.xlu0 %1406
        %1408 = vrot.lane.b32.xlu0 %v531, 28
        %v1409 = vpop.permute.xlu0 %1408
        %1410 = vrot.lane.b32.xlu0 %v532, 28
        %v1411 = vpop.permute.xlu0 %1410
        %1412 = vrot.lane.b32.xlu0 %v533, 28
        %v1413 = vpop.permute.xlu0 %1412
        %1414 = vrot.lane.b32.xlu0 %v534, 28
        %v1415 = vpop.permute.xlu0 %1414
        %1416 = vrot.lane.b32.xlu0 %v535, 28
        %v1417 = vpop.permute.xlu0 %1416
        %1418 = vrot.lane.b32.xlu0 %v536, 28
        %v1419 = vpop.permute.xlu0 %1418
        %1420 = vrot.lane.b32.xlu0 %v537, 28
        %v1421 = vpop.permute.xlu0 %1420
        %1422 = vrot.lane.b32.xlu0 %v538, 28
        %v1423 = vpop.permute.xlu0 %1422
        %1424 = vrot.lane.b32.xlu0 %v539, 28
        %v1425 = vpop.permute.xlu0 %1424
        %1426 = vrot.lane.b32.xlu0 %v540, 28
        %v1427 = vpop.permute.xlu0 %1426
        %1428 = vrot.lane.b32.xlu0 %v541, 28
        %v1429 = vpop.permute.xlu0 %1428
        %1430 = vrot.lane.b32.xlu0 %v542, 28
        %v1431 = vpop.permute.xlu0 %1430
        %1432 = vrot.lane.b32.xlu0 %v543, 28
        %v1433 = vpop.permute.xlu0 %1432
        %1434 = vrot.lane.b32.xlu0 %v544, 28
        %v1435 = vpop.permute.xlu0 %1434
        %1436 = vrot.lane.b32.xlu0 %v545, 28
        %v1437 = vpop.permute.xlu0 %1436
        %1438 = vrot.lane.b32.xlu0 %v546, 28
        %v1439 = vpop.permute.xlu0 %1438
        %1440 = vrot.lane.b32.xlu0 %v547, 28
        %v1441 = vpop.permute.xlu0 %1440
        %1442 = vrot.lane.b32.xlu0 %v548, 28
        %v1443 = vpop.permute.xlu0 %1442
        %1444 = vrot.lane.b32.xlu0 %v549, 28
        %v1445 = vpop.permute.xlu0 %1444
        %1510 = vrot.lane.b32.xlu0 %v550, 32
        %v1511 = vpop.permute.xlu0 %1510
        %1512 = vrot.lane.b32.xlu0 %v551, 32
        %v1513 = vpop.permute.xlu0 %1512
        %1514 = vrot.lane.b32.xlu0 %v552, 32
        %v1515 = vpop.permute.xlu0 %1514
        %1516 = vrot.lane.b32.xlu0 %v553, 32
        %v1517 = vpop.permute.xlu0 %1516
        %1518 = vrot.lane.b32.xlu0 %v554, 32
        %v1519 = vpop.permute.xlu0 %1518
        %1520 = vrot.lane.b32.xlu0 %v555, 32
        %v1521 = vpop.permute.xlu0 %1520
        %1522 = vrot.lane.b32.xlu0 %v556, 32
        %v1523 = vpop.permute.xlu0 %1522
        %1524 = vrot.lane.b32.xlu0 %v557, 32
        %v1525 = vpop.permute.xlu0 %1524
        %1526 = vrot.lane.b32.xlu0 %v558, 32
        %v1527 = vpop.permute.xlu0 %1526
        %1528 = vrot.lane.b32.xlu0 %v559, 32
        %v1529 = vpop.permute.xlu0 %1528
        %1530 = vrot.lane.b32.xlu0 %v560, 32
        %v1531 = vpop.permute.xlu0 %1530
        %1532 = vrot.lane.b32.xlu0 %v561, 32
        %v1533 = vpop.permute.xlu0 %1532
        %1534 = vrot.lane.b32.xlu0 %v562, 32
        %v1535 = vpop.permute.xlu0 %1534
        %1536 = vrot.lane.b32.xlu0 %v563, 32
        %v1537 = vpop.permute.xlu0 %1536
        %1538 = vrot.lane.b32.xlu0 %v564, 32
        %v1539 = vpop.permute.xlu0 %1538
        %1540 = vrot.lane.b32.xlu0 %v565, 32
        %v1541 = vpop.permute.xlu0 %1540
        %1542 = vrot.lane.b32.xlu0 %v566, 32
        %v1543 = vpop.permute.xlu0 %1542
        %1544 = vrot.lane.b32.xlu0 %v567, 32
        %v1545 = vpop.permute.xlu0 %1544
        %1546 = vrot.lane.b32.xlu0 %v568, 32
        %v1547 = vpop.permute.xlu0 %1546
        %1548 = vrot.lane.b32.xlu0 %v569, 32
        %v1549 = vpop.permute.xlu0 %1548
        %1550 = vrot.lane.b32.xlu0 %v570, 32
        %v1551 = vpop.permute.xlu0 %1550
        %1552 = vrot.lane.b32.xlu0 %v571, 32
        %v1553 = vpop.permute.xlu0 %1552
        %1554 = vrot.lane.b32.xlu0 %v572, 32
        %v1555 = vpop.permute.xlu0 %1554
        %1556 = vrot.lane.b32.xlu0 %v573, 32
        %v1557 = vpop.permute.xlu0 %1556
        %1558 = vrot.lane.b32.xlu0 %v574, 32
        %v1559 = vpop.permute.xlu0 %1558
        %1560 = vrot.lane.b32.xlu0 %v575, 32
        %v1561 = vpop.permute.xlu0 %1560
        %1562 = vrot.lane.b32.xlu0 %v576, 32
        %v1563 = vpop.permute.xlu0 %1562
        %1564 = vrot.lane.b32.xlu0 %v577, 32
        %v1565 = vpop.permute.xlu0 %1564
        %1566 = vrot.lane.b32.xlu0 %v578, 32
        %v1567 = vpop.permute.xlu0 %1566
        %1568 = vrot.lane.b32.xlu0 %v579, 32
        %v1569 = vpop.permute.xlu0 %1568
        %1570 = vrot.lane.b32.xlu0 %v580, 32
        %v1571 = vpop.permute.xlu0 %1570
        %1572 = vrot.lane.b32.xlu0 %v581, 32
        %v1573 = vpop.permute.xlu0 %1572
        %v1606 = vsel %vm182, %v293, %v615
        %v1607 = vsel %vm182, %v294, %v617
        %v1608 = vsel %vm182, %v295, %v619
        %v1609 = vsel %vm182, %v296, %v621
        %v1610 = vsel %vm182, %v297, %v623
        %v1611 = vsel %vm182, %v298, %v625
        %v1612 = vsel %vm182, %v299, %v627
        %v1613 = vsel %vm182, %v300, %v629
        %v1614 = vsel %vm182, %v301, %v631
        %v1615 = vsel %vm182, %v302, %v633
        %v1616 = vsel %vm182, %v303, %v635
        %v1617 = vsel %vm182, %v304, %v637
        %v1618 = vsel %vm182, %v305, %v639
        %v1619 = vsel %vm182, %v306, %v641
        %v1620 = vsel %vm182, %v307, %v643
        %v1621 = vsel %vm182, %v308, %v645
        %v1622 = vsel %vm182, %v309, %v647
        %v1623 = vsel %vm182, %v310, %v649
        %v1624 = vsel %vm182, %v311, %v651
        %v1625 = vsel %vm182, %v312, %v653
        %v1626 = vsel %vm182, %v313, %v655
        %v1627 = vsel %vm182, %v314, %v657
        %v1628 = vsel %vm182, %v315, %v659
        %v1629 = vsel %vm182, %v316, %v661
        %v1630 = vsel %vm182, %v317, %v663
        %v1631 = vsel %vm182, %v318, %v665
        %v1632 = vsel %vm182, %v319, %v667
        %v1633 = vsel %vm182, %v320, %v669
        %v1634 = vsel %vm182, %v321, %v671
        %v1635 = vsel %vm182, %v322, %v673
        %v1636 = vsel %vm182, %v323, %v675
        %v1637 = vsel %vm182, %v324, %v677
        %vm1638 = vcmask 64512
        %v1639 = vsel %vm1638, %v1606, %v743
        %v1640 = vsel %vm1638, %v1607, %v745
        %v1641 = vsel %vm1638, %v1608, %v747
        %v1642 = vsel %vm1638, %v1609, %v749
        %v1643 = vsel %vm1638, %v1610, %v751
        %v1644 = vsel %vm1638, %v1611, %v753
        %v1645 = vsel %vm1638, %v1612, %v755
        %v1646 = vsel %vm1638, %v1613, %v757
        %v1647 = vsel %vm1638, %v1614, %v759
        %v1648 = vsel %vm1638, %v1615, %v761
        %v1649 = vsel %vm1638, %v1616, %v763
        %v1650 = vsel %vm1638, %v1617, %v765
        %v1651 = vsel %vm1638, %v1618, %v767
        %v1652 = vsel %vm1638, %v1619, %v769
        %v1653 = vsel %vm1638, %v1620, %v771
        %v1654 = vsel %vm1638, %v1621, %v773
        %v1655 = vsel %vm1638, %v1622, %v775
        %v1656 = vsel %vm1638, %v1623, %v777
        %v1657 = vsel %vm1638, %v1624, %v779
        %v1658 = vsel %vm1638, %v1625, %v781
        %v1659 = vsel %vm1638, %v1626, %v783
        %v1660 = vsel %vm1638, %v1627, %v785
        %v1661 = vsel %vm1638, %v1628, %v787
        %v1662 = vsel %vm1638, %v1629, %v789
        %v1663 = vsel %vm1638, %v1630, %v791
        %v1664 = vsel %vm1638, %v1631, %v793
        %v1665 = vsel %vm1638, %v1632, %v795
        %v1666 = vsel %vm1638, %v1633, %v797
        %v1667 = vsel %vm1638, %v1634, %v799
        %v1668 = vsel %vm1638, %v1635, %v801
        %v1669 = vsel %vm1638, %v1636, %v803
        %v1670 = vsel %vm1638, %v1637, %v805
        %vm1671 = vcmask 97280
        %v1672 = vsel %vm1671, %v1639, %v871
        %v1673 = vsel %vm1671, %v1640, %v873
        %v1674 = vsel %vm1671, %v1641, %v875
        %v1675 = vsel %vm1671, %v1642, %v877
        %v1676 = vsel %vm1671, %v1643, %v879
        %v1677 = vsel %vm1671, %v1644, %v881
        %v1678 = vsel %vm1671, %v1645, %v883
        %v1679 = vsel %vm1671, %v1646, %v885
        %v1680 = vsel %vm1671, %v1647, %v887
        %v1681 = vsel %vm1671, %v1648, %v889
        %v1682 = vsel %vm1671, %v1649, %v891
        %v1683 = vsel %vm1671, %v1650, %v893
        %v1684 = vsel %vm1671, %v1651, %v895
        %v1685 = vsel %vm1671, %v1652, %v897
        %v1686 = vsel %vm1671, %v1653, %v899
        %v1687 = vsel %vm1671, %v1654, %v901
        %v1688 = vsel %vm1671, %v1655, %v903
        %v1689 = vsel %vm1671, %v1656, %v905
        %v1690 = vsel %vm1671, %v1657, %v907
        %v1691 = vsel %vm1671, %v1658, %v909
        %v1692 = vsel %vm1671, %v1659, %v911
        %v1693 = vsel %vm1671, %v1660, %v913
        %v1694 = vsel %vm1671, %v1661, %v915
        %v1695 = vsel %vm1671, %v1662, %v917
        %v1696 = vsel %vm1671, %v1663, %v919
        %v1697 = vsel %vm1671, %v1664, %v921
        %v1698 = vsel %vm1671, %v1665, %v923
        %v1699 = vsel %vm1671, %v1666, %v925
        %v1700 = vsel %vm1671, %v1667, %v927
        %v1701 = vsel %vm1671, %v1668, %v929
        %v1702 = vsel %vm1671, %v1669, %v931
        %v1703 = vsel %vm1671, %v1670, %v933
        %vm1704 = vcmask 130048
        %v1705 = vsel %vm1704, %v1672, %v999
        %v1706 = vsel %vm1704, %v1673, %v1001
        %v1707 = vsel %vm1704, %v1674, %v1003
        %v1708 = vsel %vm1704, %v1675, %v1005
        %v1709 = vsel %vm1704, %v1676, %v1007
        %v1710 = vsel %vm1704, %v1677, %v1009
        %v1711 = vsel %vm1704, %v1678, %v1011
        %v1712 = vsel %vm1704, %v1679, %v1013
        %v1713 = vsel %vm1704, %v1680, %v1015
        %v1714 = vsel %vm1704, %v1681, %v1017
        %v1715 = vsel %vm1704, %v1682, %v1019
        %v1716 = vsel %vm1704, %v1683, %v1021
        %v1717 = vsel %vm1704, %v1684, %v1023
        %v1718 = vsel %vm1704, %v1685, %v1025
        %v1719 = vsel %vm1704, %v1686, %v1027
        %v1720 = vsel %vm1704, %v1687, %v1029
        %v1721 = vsel %vm1704, %v1688, %v1031
        %v1722 = vsel %vm1704, %v1689, %v1033
        %v1723 = vsel %vm1704, %v1690, %v1035
        %v1724 = vsel %vm1704, %v1691, %v1037
        %v1725 = vsel %vm1704, %v1692, %v1039
        %v1726 = vsel %vm1704, %v1693, %v1041
        %v1727 = vsel %vm1704, %v1694, %v1043
        %v1728 = vsel %vm1704, %v1695, %v1045
        %v1729 = vsel %vm1704, %v1696, %v1047
        %v1730 = vsel %vm1704, %v1697, %v1049
        %v1731 = vsel %vm1704, %v1698, %v1051
        %v1732 = vsel %vm1704, %v1699, %v1053
        %v1733 = vsel %vm1704, %v1700, %v1055
        %v1734 = vsel %vm1704, %v1701, %v1057
        %v1735 = vsel %vm1704, %v1702, %v1059
        %v1736 = vsel %vm1704, %v1703, %v1061
        %vm1737 = vcmask 162816
        %v1738 = vsel %vm1737, %v1705, %v1127
        %v1739 = vsel %vm1737, %v1706, %v1129
        %v1740 = vsel %vm1737, %v1707, %v1131
        %v1741 = vsel %vm1737, %v1708, %v1133
        %v1742 = vsel %vm1737, %v1709, %v1135
        %v1743 = vsel %vm1737, %v1710, %v1137
        %v1744 = vsel %vm1737, %v1711, %v1139
        %v1745 = vsel %vm1737, %v1712, %v1141
        %v1746 = vsel %vm1737, %v1713, %v1143
        %v1747 = vsel %vm1737, %v1714, %v1145
        %v1748 = vsel %vm1737, %v1715, %v1147
        %v1749 = vsel %vm1737, %v1716, %v1149
        %v1750 = vsel %vm1737, %v1717, %v1151
        %v1751 = vsel %vm1737, %v1718, %v1153
        %v1752 = vsel %vm1737, %v1719, %v1155
        %v1753 = vsel %vm1737, %v1720, %v1157
        %v1754 = vsel %vm1737, %v1721, %v1159
        %v1755 = vsel %vm1737, %v1722, %v1161
        %v1756 = vsel %vm1737, %v1723, %v1163
        %v1757 = vsel %vm1737, %v1724, %v1165
        %v1758 = vsel %vm1737, %v1725, %v1167
        %v1759 = vsel %vm1737, %v1726, %v1169
        %v1760 = vsel %vm1737, %v1727, %v1171
        %v1761 = vsel %vm1737, %v1728, %v1173
        %v1762 = vsel %vm1737, %v1729, %v1175
        %v1763 = vsel %vm1737, %v1730, %v1177
        %v1764 = vsel %vm1737, %v1731, %v1179
        %v1765 = vsel %vm1737, %v1732, %v1181
        %v1766 = vsel %vm1737, %v1733, %v1183
        %v1767 = vsel %vm1737, %v1734, %v1185
        %v1768 = vsel %vm1737, %v1735, %v1187
        %v1769 = vsel %vm1737, %v1736, %v1189
        %vm1770 = vcmask 195584
        %v1771 = vsel %vm1770, %v1738, %v1255
        %v1772 = vsel %vm1770, %v1739, %v1257
        %v1773 = vsel %vm1770, %v1740, %v1259
        %v1774 = vsel %vm1770, %v1741, %v1261
        %v1775 = vsel %vm1770, %v1742, %v1263
        %v1776 = vsel %vm1770, %v1743, %v1265
        %v1777 = vsel %vm1770, %v1744, %v1267
        %v1778 = vsel %vm1770, %v1745, %v1269
        %v1779 = vsel %vm1770, %v1746, %v1271
        %v1780 = vsel %vm1770, %v1747, %v1273
        %v1781 = vsel %vm1770, %v1748, %v1275
        %v1782 = vsel %vm1770, %v1749, %v1277
        %v1783 = vsel %vm1770, %v1750, %v1279
        %v1784 = vsel %vm1770, %v1751, %v1281
        %v1785 = vsel %vm1770, %v1752, %v1283
        %v1786 = vsel %vm1770, %v1753, %v1285
        %v1787 = vsel %vm1770, %v1754, %v1287
        %v1788 = vsel %vm1770, %v1755, %v1289
        %v1789 = vsel %vm1770, %v1756, %v1291
        %v1790 = vsel %vm1770, %v1757, %v1293
        %v1791 = vsel %vm1770, %v1758, %v1295
        %v1792 = vsel %vm1770, %v1759, %v1297
        %v1793 = vsel %vm1770, %v1760, %v1299
        %v1794 = vsel %vm1770, %v1761, %v1301
        %v1795 = vsel %vm1770, %v1762, %v1303
        %v1796 = vsel %vm1770, %v1763, %v1305
        %v1797 = vsel %vm1770, %v1764, %v1307
        %v1798 = vsel %vm1770, %v1765, %v1309
        %v1799 = vsel %vm1770, %v1766, %v1311
        %v1800 = vsel %vm1770, %v1767, %v1313
        %v1801 = vsel %vm1770, %v1768, %v1315
        %v1802 = vsel %vm1770, %v1769, %v1317
        %vm1803 = vcmask 228352
        %v1804 = vsel %vm1803, %v1771, %v1383
        %v1805 = vsel %vm1803, %v1772, %v1385
        %v1806 = vsel %vm1803, %v1773, %v1387
        %v1807 = vsel %vm1803, %v1774, %v1389
        %v1808 = vsel %vm1803, %v1775, %v1391
        %v1809 = vsel %vm1803, %v1776, %v1393
        %v1810 = vsel %vm1803, %v1777, %v1395
        %v1811 = vsel %vm1803, %v1778, %v1397
        %v1812 = vsel %vm1803, %v1779, %v1399
        %v1813 = vsel %vm1803, %v1780, %v1401
        %v1814 = vsel %vm1803, %v1781, %v1403
        %v1815 = vsel %vm1803, %v1782, %v1405
        %v1816 = vsel %vm1803, %v1783, %v1407
        %v1817 = vsel %vm1803, %v1784, %v1409
        %v1818 = vsel %vm1803, %v1785, %v1411
        %v1819 = vsel %vm1803, %v1786, %v1413
        %v1820 = vsel %vm1803, %v1787, %v1415
        %v1821 = vsel %vm1803, %v1788, %v1417
        %v1822 = vsel %vm1803, %v1789, %v1419
        %v1823 = vsel %vm1803, %v1790, %v1421
        %v1824 = vsel %vm1803, %v1791, %v1423
        %v1825 = vsel %vm1803, %v1792, %v1425
        %v1826 = vsel %vm1803, %v1793, %v1427
        %v1827 = vsel %vm1803, %v1794, %v1429
        %v1828 = vsel %vm1803, %v1795, %v1431
        %v1829 = vsel %vm1803, %v1796, %v1433
        %v1830 = vsel %vm1803, %v1797, %v1435
        %v1831 = vsel %vm1803, %v1798, %v1437
        %v1832 = vsel %vm1803, %v1799, %v1439
        %v1833 = vsel %vm1803, %v1800, %v1441
        %v1834 = vsel %vm1803, %v1801, %v1443
        %v1835 = vsel %vm1803, %v1802, %v1445
        %vm1836 = vcmask 261120
        %v1837 = vsel %vm1836, %v1804, %v1511
        %v1838 = vsel %vm1836, %v1805, %v1513
        %v1839 = vsel %vm1836, %v1806, %v1515
        %v1840 = vsel %vm1836, %v1807, %v1517
        %v1841 = vsel %vm1836, %v1808, %v1519
        %v1842 = vsel %vm1836, %v1809, %v1521
        %v1843 = vsel %vm1836, %v1810, %v1523
        %v1844 = vsel %vm1836, %v1811, %v1525
        %v1845 = vsel %vm1836, %v1812, %v1527
        %v1846 = vsel %vm1836, %v1813, %v1529
        %v1847 = vsel %vm1836, %v1814, %v1531
        %v1848 = vsel %vm1836, %v1815, %v1533
        %v1849 = vsel %vm1836, %v1816, %v1535
        %v1850 = vsel %vm1836, %v1817, %v1537
        %v1851 = vsel %vm1836, %v1818, %v1539
        %v1852 = vsel %vm1836, %v1819, %v1541
        %v1853 = vsel %vm1836, %v1820, %v1543
        %v1854 = vsel %vm1836, %v1821, %v1545
        %v1855 = vsel %vm1836, %v1822, %v1547
        %v1856 = vsel %vm1836, %v1823, %v1549
        %v1857 = vsel %vm1836, %v1824, %v1551
        %v1858 = vsel %vm1836, %v1825, %v1553
        %v1859 = vsel %vm1836, %v1826, %v1555
        %v1860 = vsel %vm1836, %v1827, %v1557
        %v1861 = vsel %vm1836, %v1828, %v1559
        %v1862 = vsel %vm1836, %v1829, %v1561
        %v1863 = vsel %vm1836, %v1830, %v1563
        %v1864 = vsel %vm1836, %v1831, %v1565
        %v1865 = vsel %vm1836, %v1832, %v1567
        %v1866 = vsel %vm1836, %v1833, %v1569
        %v1867 = vsel %vm1836, %v1834, %v1571
        %v1868 = vsel %vm1836, %v1835, %v1573
        %v1869 = vld [vmem:[%s1] sm:$0xff]
        %v1870 = vld [vmem:[%s1 + $0x8] sm:$0xff]
        %v1871 = vld [vmem:[%s1 + $0x10] sm:$0xff]
        %v1872 = vld [vmem:[%s1 + $0x18] sm:$0xff]
        %v1873 = vld [vmem:[%s1 + $0x20] sm:$0xf]
        %vm1874 = vcmask 293888
        %v1876 = vsel %vm1874, %v1837, 0
        %v1879 = vsel %vm1874, %v1838, 0
        %v1882 = vsel %vm1874, %v1839, 0
        %v1885 = vsel %vm1874, %v1840, 0
        %v1888 = vsel %vm1874, %v1841, 0
        %v1891 = vsel %vm1874, %v1842, 0
        %v1894 = vsel %vm1874, %v1843, 0
        %v1897 = vsel %vm1874, %v1844, 0
        %v1900 = vsel %vm1874, %v1845, 0
        %v1903 = vsel %vm1874, %v1846, 0
        %v1906 = vsel %vm1874, %v1847, 0
        %v1909 = vsel %vm1874, %v1848, 0
        %v1912 = vsel %vm1874, %v1849, 0
        %v1915 = vsel %vm1874, %v1850, 0
        %v1918 = vsel %vm1874, %v1851, 0
        %v1921 = vsel %vm1874, %v1852, 0
        %v1924 = vsel %vm1874, %v1853, 0
        %v1927 = vsel %vm1874, %v1854, 0
        %v1930 = vsel %vm1874, %v1855, 0
        %v1933 = vsel %vm1874, %v1856, 0
        %v1936 = vsel %vm1874, %v1857, 0
        %v1939 = vsel %vm1874, %v1858, 0
        %v1942 = vsel %vm1874, %v1859, 0
        %v1945 = vsel %vm1874, %v1860, 0
        %v1948 = vsel %vm1874, %v1861, 0
        %v1951 = vsel %vm1874, %v1862, 0
        %v1954 = vsel %vm1874, %v1863, 0
        %v1957 = vsel %vm1874, %v1864, 0
        %v1960 = vsel %vm1874, %v1865, 0
        %v1963 = vsel %vm1874, %v1866, 0
        %v1966 = vsel %vm1874, %v1867, 0
        %v1969 = vsel %vm1874, %v1868, 0
        %vm1971 = vcmask 1043456
        %v1973 = vsel %vm1971, %v1873, 0
        %1975 = vmatprep.subr.mxu0 0.0
        %1976 = vmatpush1.msra.mxu0 0.0
        %1977 = vmatprep.subr.mxu0 0.0
        %1978 = vmatpush1.msra.mxu0 0.0
        %1979 = vmatprep.subr.mxu0 0.0
        %1980 = vmatpush1.msra.mxu0 0.0
        %1981 = vmatprep.subr.mxu0 0.0
        %1982 = vmatpush1.msra.mxu0 0.0
        %1983 = vmatprep.subr.mxu0 0.0
        %1984 = vmatpush1.msra.mxu0 0.0
        %1985 = vmatprep.subr.mxu0 0.0
        %1986 = vmatpush1.msra.mxu0 0.0
        %1987 = vmatprep.subr.mxu0 0.0
        %1988 = vmatpush1.msra.mxu0 0.0
        %1989 = vmatprep.subr.mxu0 0.0
        %1990 = vmatpush1.msra.mxu0 0.0
        %1991 = vmatprep.subr.mxu0 0.0
        %1992 = vmatpush1.msra.mxu0 0.0
        %1993 = vmatprep.subr.mxu0 0.0
        %1994 = vmatpush1.msra.mxu0 0.0
        %1995 = vmatprep.subr.mxu0 0.0
        %1996 = vmatpush1.msra.mxu0 0.0
        %1997 = vmatprep.subr.mxu0 0.0
        %1998 = vmatpush1.msra.mxu0 %v1973
        %1999 = vmatprep.subr.mxu0 0.0
        %2000 = vmatpush1.msra.mxu0 %v1872
        %2001 = vmatprep.subr.mxu0 0.0
        %2002 = vmatpush1.msra.mxu0 %v1871
        %2003 = vmatprep.subr.mxu0 0.0
        %2004 = vmatpush1.msra.mxu0 %v1870
        %2005 = vmatprep.subr.mxu0 0.0
        %2006 = vmatpush1.msra.mxu0 %v1869
        %2007 = vmatprep.subr.mxu0 0.0
        %2008 = vmatpush2.msra.mxu0 0.0
        %2009 = vmatprep.subr.mxu0 0.0
        %2010 = vmatpush2.msra.mxu0 0.0
        %2011 = vmatprep.subr.mxu0 0.0
        %2012 = vmatpush2.msra.mxu0 0.0
        %2013 = vmatprep.subr.mxu0 0.0
        %2014 = vmatpush2.msra.mxu0 0.0
        %2015 = vmatprep.subr.mxu0 0.0
        %2016 = vmatpush2.msra.mxu0 0.0
        %2017 = vmatprep.subr.mxu0 0.0
        %2018 = vmatpush2.msra.mxu0 0.0
        %2019 = vmatprep.subr.mxu0 0.0
        %2020 = vmatpush2.msra.mxu0 0.0
        %2021 = vmatprep.subr.mxu0 0.0
        %2022 = vmatpush2.msra.mxu0 0.0
        %2023 = vmatprep.subr.mxu0 0.0
        %2024 = vmatpush2.msra.mxu0 0.0
        %2025 = vmatprep.subr.mxu0 0.0
        %2026 = vmatpush2.msra.mxu0 0.0
        %2027 = vmatprep.subr.mxu0 0.0
        %2028 = vmatpush2.msra.mxu0 0.0
        %2029 = vmatprep.subr.mxu0 0.0
        %2030 = vmatpush2.msra.mxu0 0.0
        %2031 = vmatprep.subr.mxu0 0.0
        %2032 = vmatpush2.msra.mxu0 0.0
        %2033 = vmatprep.subr.mxu0 0.0
        %2034 = vmatpush2.msra.mxu0 0.0
        %2035 = vmatprep.subr.mxu0 0.0
        %2036 = vmatpush2.msra.mxu0 0.0
        %2037 = vmatprep.subr.mxu0 0.0
        %2038 = vmatpush2.msra.mxu0 0.0
        %2039 = vmatprep.mubr.f32.mxu0 0.0
        %2040 = vmatmul.mubr.f32.gmra.mxu0 %v1876
        %v2041 = vpop.f32.mrf.mxu0
        %v2042 = vadd.f32 0.0, %v2041
        %v2043 = vpop.f32.mrf.mxu0
        %2044 = vmatprep.mubr.f32.mxu0 0.0
        %2045 = vmatmul.mubr.f32.gmra.mxu0 %v1879
        %v2046 = vpop.f32.mrf.mxu0
        %v2047 = vadd.f32 0.0, %v2046
        %v2048 = vpop.f32.mrf.mxu0
        %2049 = vmatprep.mubr.f32.mxu0 0.0
        %2050 = vmatmul.mubr.f32.gmra.mxu0 %v1882
        %v2051 = vpop.f32.mrf.mxu0
        %v2052 = vadd.f32 0.0, %v2051
        %v2053 = vpop.f32.mrf.mxu0
        %2054 = vmatprep.mubr.f32.mxu0 0.0
        %2055 = vmatmul.mubr.f32.gmra.mxu0 %v1885
        %v2056 = vpop.f32.mrf.mxu0
        %v2057 = vadd.f32 0.0, %v2056
        %v2058 = vpop.f32.mrf.mxu0
        %2059 = vmatprep.mubr.f32.mxu0 0.0
        %2060 = vmatmul.mubr.f32.gmra.mxu0 %v1888
        %v2061 = vpop.f32.mrf.mxu0
        %v2062 = vadd.f32 0.0, %v2061
        %v2063 = vpop.f32.mrf.mxu0
        %2064 = vmatprep.mubr.f32.mxu0 0.0
        %2065 = vmatmul.mubr.f32.gmra.mxu0 %v1891
        %v2066 = vpop.f32.mrf.mxu0
        %v2067 = vadd.f32 0.0, %v2066
        %v2068 = vpop.f32.mrf.mxu0
        %2069 = vmatprep.mubr.f32.mxu0 0.0
        %2070 = vmatmul.mubr.f32.gmra.mxu0 %v1894
        %v2071 = vpop.f32.mrf.mxu0
        %v2072 = vadd.f32 0.0, %v2071
        %v2073 = vpop.f32.mrf.mxu0
        %2074 = vmatprep.mubr.f32.mxu0 0.0
        %2075 = vmatmul.mubr.f32.gmra.mxu0 %v1897
        %v2076 = vpop.f32.mrf.mxu0
        %v2077 = vadd.f32 0.0, %v2076
        %v2078 = vpop.f32.mrf.mxu0
        %2079 = vmatprep.mubr.f32.mxu0 0.0
        %2080 = vmatmul.mubr.f32.gmra.mxu0 %v1900
        %v2081 = vpop.f32.mrf.mxu0
        %v2082 = vadd.f32 0.0, %v2081
        %v2083 = vpop.f32.mrf.mxu0
        %2084 = vmatprep.mubr.f32.mxu0 0.0
        %2085 = vmatmul.mubr.f32.gmra.mxu0 %v1903
        %v2086 = vpop.f32.mrf.mxu0
        %v2087 = vadd.f32 0.0, %v2086
        %v2088 = vpop.f32.mrf.mxu0
        %2089 = vmatprep.mubr.f32.mxu0 0.0
        %2090 = vmatmul.mubr.f32.gmra.mxu0 %v1906
        %v2091 = vpop.f32.mrf.mxu0
        %v2092 = vadd.f32 0.0, %v2091
        %v2093 = vpop.f32.mrf.mxu0
        %2094 = vmatprep.mubr.f32.mxu0 0.0
        %2095 = vmatmul.mubr.f32.gmra.mxu0 %v1909
        %v2096 = vpop.f32.mrf.mxu0
        %v2097 = vadd.f32 0.0, %v2096
        %v2098 = vpop.f32.mrf.mxu0
        %2099 = vmatprep.mubr.f32.mxu0 0.0
        %2100 = vmatmul.mubr.f32.gmra.mxu0 %v1912
        %v2101 = vpop.f32.mrf.mxu0
        %v2102 = vadd.f32 0.0, %v2101
        %v2103 = vpop.f32.mrf.mxu0
        %2104 = vmatprep.mubr.f32.mxu0 0.0
        %2105 = vmatmul.mubr.f32.gmra.mxu0 %v1915
        %v2106 = vpop.f32.mrf.mxu0
        %v2107 = vadd.f32 0.0, %v2106
        %v2108 = vpop.f32.mrf.mxu0
        %2109 = vmatprep.mubr.f32.mxu0 0.0
        %2110 = vmatmul.mubr.f32.gmra.mxu0 %v1918
        %v2111 = vpop.f32.mrf.mxu0
        %v2112 = vadd.f32 0.0, %v2111
        %v2113 = vpop.f32.mrf.mxu0
        %2114 = vmatprep.mubr.f32.mxu0 0.0
        %2115 = vmatmul.mubr.f32.gmra.mxu0 %v1921
        %v2116 = vpop.f32.mrf.mxu0
        %v2117 = vadd.f32 0.0, %v2116
        %v2118 = vpop.f32.mrf.mxu0
        %2119 = vmatprep.mubr.f32.mxu0 0.0
        %2120 = vmatmul.mubr.f32.gmra.mxu0 %v1924
        %v2121 = vpop.f32.mrf.mxu0
        %v2122 = vadd.f32 0.0, %v2121
        %v2123 = vpop.f32.mrf.mxu0
        %2124 = vmatprep.mubr.f32.mxu0 0.0
        %2125 = vmatmul.mubr.f32.gmra.mxu0 %v1927
        %v2126 = vpop.f32.mrf.mxu0
        %v2127 = vadd.f32 0.0, %v2126
        %v2128 = vpop.f32.mrf.mxu0
        %2129 = vmatprep.mubr.f32.mxu0 0.0
        %2130 = vmatmul.mubr.f32.gmra.mxu0 %v1930
        %v2131 = vpop.f32.mrf.mxu0
        %v2132 = vadd.f32 0.0, %v2131
        %v2133 = vpop.f32.mrf.mxu0
        %2134 = vmatprep.mubr.f32.mxu0 0.0
        %2135 = vmatmul.mubr.f32.gmra.mxu0 %v1933
        %v2136 = vpop.f32.mrf.mxu0
        %v2137 = vadd.f32 0.0, %v2136
        %v2138 = vpop.f32.mrf.mxu0
        %2139 = vmatprep.mubr.f32.mxu0 0.0
        %2140 = vmatmul.mubr.f32.gmra.mxu0 %v1936
        %v2141 = vpop.f32.mrf.mxu0
        %v2142 = vadd.f32 0.0, %v2141
        %v2143 = vpop.f32.mrf.mxu0
        %2144 = vmatprep.mubr.f32.mxu0 0.0
        %2145 = vmatmul.mubr.f32.gmra.mxu0 %v1939
        %v2146 = vpop.f32.mrf.mxu0
        %v2147 = vadd.f32 0.0, %v2146
        %v2148 = vpop.f32.mrf.mxu0
        %2149 = vmatprep.mubr.f32.mxu0 0.0
        %2150 = vmatmul.mubr.f32.gmra.mxu0 %v1942
        %v2151 = vpop.f32.mrf.mxu0
        %v2152 = vadd.f32 0.0, %v2151
        %v2153 = vpop.f32.mrf.mxu0
        %2154 = vmatprep.mubr.f32.mxu0 0.0
        %2155 = vmatmul.mubr.f32.gmra.mxu0 %v1945
        %v2156 = vpop.f32.mrf.mxu0
        %v2157 = vadd.f32 0.0, %v2156
        %v2158 = vpop.f32.mrf.mxu0
        %2159 = vmatprep.mubr.f32.mxu0 0.0
        %2160 = vmatmul.mubr.f32.gmra.mxu0 %v1948
        %v2161 = vpop.f32.mrf.mxu0
        %v2162 = vadd.f32 0.0, %v2161
        %v2163 = vpop.f32.mrf.mxu0
        %2164 = vmatprep.mubr.f32.mxu0 0.0
        %2165 = vmatmul.mubr.f32.gmra.mxu0 %v1951
        %v2166 = vpop.f32.mrf.mxu0
        %v2167 = vadd.f32 0.0, %v2166
        %v2168 = vpop.f32.mrf.mxu0
        %2169 = vmatprep.mubr.f32.mxu0 0.0
        %2170 = vmatmul.mubr.f32.gmra.mxu0 %v1954
        %v2171 = vpop.f32.mrf.mxu0
        %v2172 = vadd.f32 0.0, %v2171
        %v2173 = vpop.f32.mrf.mxu0
        %2174 = vmatprep.mubr.f32.mxu0 0.0
        %2175 = vmatmul.mubr.f32.gmra.mxu0 %v1957
        %v2176 = vpop.f32.mrf.mxu0
        %v2177 = vadd.f32 0.0, %v2176
        %v2178 = vpop.f32.mrf.mxu0
        %2179 = vmatprep.mubr.f32.mxu0 0.0
        %2180 = vmatmul.mubr.f32.gmra.mxu0 %v1960
        %v2181 = vpop.f32.mrf.mxu0
        %v2182 = vadd.f32 0.0, %v2181
        %v2183 = vpop.f32.mrf.mxu0
        %2184 = vmatprep.mubr.f32.mxu0 0.0
        %2185 = vmatmul.mubr.f32.gmra.mxu0 %v1963
        %v2186 = vpop.f32.mrf.mxu0
        %v2187 = vadd.f32 0.0, %v2186
        %v2188 = vpop.f32.mrf.mxu0
        %2189 = vmatprep.mubr.f32.mxu0 0.0
        %2190 = vmatmul.mubr.f32.gmra.mxu0 %v1966
        %v2191 = vpop.f32.mrf.mxu0
        %v2192 = vadd.f32 0.0, %v2191
        %v2193 = vpop.f32.mrf.mxu0
        %2194 = vmatprep.mubr.f32.mxu0 0.0
        %2195 = vmatmul.mubr.f32.gmra.mxu0 %v1969
        %v2196 = vpop.f32.mrf.mxu0
        %v2197 = vadd.f32 0.0, %v2196
        %v2198 = vpop.f32.mrf.mxu0
        %2199 = vdwg.mxu0
        %v2200 = vsel %vm1638, %v2042, 0.0
        %v2201 = vsel %vm1638, %v2047, 0.0
        %v2202 = vadd.f32 %v2200, %v2201
        %v2203 = vsel %vm1638, %v2052, 0.0
        %v2204 = vadd.f32 %v2202, %v2203
        %v2205 = vsel %vm1638, %v2057, 0.0
        %v2206 = vadd.f32 %v2204, %v2205
        %v2207 = vsel %vm1638, %v2062, 0.0
        %v2208 = vadd.f32 %v2206, %v2207
        %v2209 = vsel %vm1638, %v2067, 0.0
        %v2210 = vadd.f32 %v2208, %v2209
        %v2211 = vsel %vm1638, %v2072, 0.0
        %v2212 = vadd.f32 %v2210, %v2211
        %v2213 = vsel %vm1638, %v2077, 0.0
        %v2214 = vadd.f32 %v2212, %v2213
        %v2215 = vsel %vm1638, %v2082, 0.0
        %v2216 = vadd.f32 %v2214, %v2215
        %v2217 = vsel %vm1638, %v2087, 0.0
        %v2218 = vadd.f32 %v2216, %v2217
        %v2219 = vsel %vm1638, %v2092, 0.0
        %v2220 = vadd.f32 %v2218, %v2219
        %v2221 = vsel %vm1638, %v2097, 0.0
        %v2222 = vadd.f32 %v2220, %v2221
        %v2223 = vsel %vm1638, %v2102, 0.0
        %v2224 = vadd.f32 %v2222, %v2223
        %v2225 = vsel %vm1638, %v2107, 0.0
        %v2226 = vadd.f32 %v2224, %v2225
        %v2227 = vsel %vm1638, %v2112, 0.0
        %v2228 = vadd.f32 %v2226, %v2227
        %v2229 = vsel %vm1638, %v2117, 0.0
        %v2230 = vadd.f32 %v2228, %v2229
        %v2231 = vsel %vm1638, %v2122, 0.0
        %v2232 = vadd.f32 %v2230, %v2231
        %v2233 = vsel %vm1638, %v2127, 0.0
        %v2234 = vadd.f32 %v2232, %v2233
        %v2235 = vsel %vm1638, %v2132, 0.0
        %v2236 = vadd.f32 %v2234, %v2235
        %v2237 = vsel %vm1638, %v2137, 0.0
        %v2238 = vadd.f32 %v2236, %v2237
        %v2239 = vsel %vm1638, %v2142, 0.0
        %v2240 = vadd.f32 %v2238, %v2239
        %v2241 = vsel %vm1638, %v2147, 0.0
        %v2242 = vadd.f32 %v2240, %v2241
        %v2243 = vsel %vm1638, %v2152, 0.0
        %v2244 = vadd.f32 %v2242, %v2243
        %v2245 = vsel %vm1638, %v2157, 0.0
        %v2246 = vadd.f32 %v2244, %v2245
        %v2247 = vsel %vm1638, %v2162, 0.0
        %v2248 = vadd.f32 %v2246, %v2247
        %v2249 = vsel %vm1638, %v2167, 0.0
        %v2250 = vadd.f32 %v2248, %v2249
        %v2251 = vsel %vm1638, %v2172, 0.0
        %v2252 = vadd.f32 %v2250, %v2251
        %v2253 = vsel %vm1638, %v2177, 0.0
        %v2254 = vadd.f32 %v2252, %v2253
        %v2255 = vsel %vm1638, %v2182, 0.0
        %v2256 = vadd.f32 %v2254, %v2255
        %v2257 = vsel %vm1638, %v2187, 0.0
        %v2258 = vadd.f32 %v2256, %v2257
        %v2259 = vsel %vm1638, %v2192, 0.0
        %v2260 = vadd.f32 %v2258, %v2259
        %v2261 = vsel %vm1638, %v2197, 0.0
        %v2262 = vadd.f32 %v2260, %v2261
        %v2263 = vrot.slane %v2262, 4
        %v2264 = vadd.f32 %v2262, %v2263
        %v2265 = vrot.slane %v2264, 2
        %v2266 = vadd.f32 %v2264, %v2265
        %v2267 = vrot.slane %v2266, 1
        %v2268 = vadd.f32 %v2266, %v2267
        %vm2269 = vcmask 57344
        %2270 = vst.msk [vmem:[%s171] sm:$0x1] %vm2269, %v2268
        %v2271 = vmul.f32 %v2042, %v2042
        %v2272 = vmul.f32 %v2047, %v2047
        %v2273 = vmul.f32 %v2052, %v2052
        %v2274 = vmul.f32 %v2057, %v2057
        %v2275 = vmul.f32 %v2062, %v2062
        %v2276 = vmul.f32 %v2067, %v2067
        %v2277 = vmul.f32 %v2072, %v2072
        %v2278 = vmul.f32 %v2077, %v2077
        %v2279 = vmul.f32 %v2082, %v2082
        %v2280 = vmul.f32 %v2087, %v2087
        %v2281 = vmul.f32 %v2092, %v2092
        %v2282 = vmul.f32 %v2097, %v2097
        %v2283 = vmul.f32 %v2102, %v2102
        %v2284 = vmul.f32 %v2107, %v2107
        %v2285 = vmul.f32 %v2112, %v2112
        %v2286 = vmul.f32 %v2117, %v2117
        %v2287 = vmul.f32 %v2122, %v2122
        %v2288 = vmul.f32 %v2127, %v2127
        %v2289 = vmul.f32 %v2132, %v2132
        %v2290 = vmul.f32 %v2137, %v2137
        %v2291 = vmul.f32 %v2142, %v2142
        %v2292 = vmul.f32 %v2147, %v2147
        %v2293 = vmul.f32 %v2152, %v2152
        %v2294 = vmul.f32 %v2157, %v2157
        %v2295 = vmul.f32 %v2162, %v2162
        %v2296 = vmul.f32 %v2167, %v2167
        %v2297 = vmul.f32 %v2172, %v2172
        %v2298 = vmul.f32 %v2177, %v2177
        %v2299 = vmul.f32 %v2182, %v2182
        %v2300 = vmul.f32 %v2187, %v2187
        %v2301 = vmul.f32 %v2192, %v2192
        %v2302 = vmul.f32 %v2197, %v2197
        %v2303 = vsel %vm1638, %v2271, 0.0
        %v2304 = vsel %vm1638, %v2272, 0.0
        %v2305 = vadd.f32 %v2303, %v2304
        %v2306 = vsel %vm1638, %v2273, 0.0
        %v2307 = vadd.f32 %v2305, %v2306
        %v2308 = vsel %vm1638, %v2274, 0.0
        %v2309 = vadd.f32 %v2307, %v2308
        %v2310 = vsel %vm1638, %v2275, 0.0
        %v2311 = vadd.f32 %v2309, %v2310
        %v2312 = vsel %vm1638, %v2276, 0.0
        %v2313 = vadd.f32 %v2311, %v2312
        %v2314 = vsel %vm1638, %v2277, 0.0
        %v2315 = vadd.f32 %v2313, %v2314
        %v2316 = vsel %vm1638, %v2278, 0.0
        %v2317 = vadd.f32 %v2315, %v2316
        %v2318 = vsel %vm1638, %v2279, 0.0
        %v2319 = vadd.f32 %v2317, %v2318
        %v2320 = vsel %vm1638, %v2280, 0.0
        %v2321 = vadd.f32 %v2319, %v2320
        %v2322 = vsel %vm1638, %v2281, 0.0
        %v2323 = vadd.f32 %v2321, %v2322
        %v2324 = vsel %vm1638, %v2282, 0.0
        %v2325 = vadd.f32 %v2323, %v2324
        %v2326 = vsel %vm1638, %v2283, 0.0
        %v2327 = vadd.f32 %v2325, %v2326
        %v2328 = vsel %vm1638, %v2284, 0.0
        %v2329 = vadd.f32 %v2327, %v2328
        %v2330 = vsel %vm1638, %v2285, 0.0
        %v2331 = vadd.f32 %v2329, %v2330
        %v2332 = vsel %vm1638, %v2286, 0.0
        %v2333 = vadd.f32 %v2331, %v2332
        %v2334 = vsel %vm1638, %v2287, 0.0
        %v2335 = vadd.f32 %v2333, %v2334
        %v2336 = vsel %vm1638, %v2288, 0.0
        %v2337 = vadd.f32 %v2335, %v2336
        %v2338 = vsel %vm1638, %v2289, 0.0
        %v2339 = vadd.f32 %v2337, %v2338
        %v2340 = vsel %vm1638, %v2290, 0.0
        %v2341 = vadd.f32 %v2339, %v2340
        %v2342 = vsel %vm1638, %v2291, 0.0
        %v2343 = vadd.f32 %v2341, %v2342
        %v2344 = vsel %vm1638, %v2292, 0.0
        %v2345 = vadd.f32 %v2343, %v2344
        %v2346 = vsel %vm1638, %v2293, 0.0
        %v2347 = vadd.f32 %v2345, %v2346
        %v2348 = vsel %vm1638, %v2294, 0.0
        %v2349 = vadd.f32 %v2347, %v2348
        %v2350 = vsel %vm1638, %v2295, 0.0
        %v2351 = vadd.f32 %v2349, %v2350
        %v2352 = vsel %vm1638, %v2296, 0.0
        %v2353 = vadd.f32 %v2351, %v2352
        %v2354 = vsel %vm1638, %v2297, 0.0
        %v2355 = vadd.f32 %v2353, %v2354
        %v2356 = vsel %vm1638, %v2298, 0.0
        %v2357 = vadd.f32 %v2355, %v2356
        %v2358 = vsel %vm1638, %v2299, 0.0
        %v2359 = vadd.f32 %v2357, %v2358
        %v2360 = vsel %vm1638, %v2300, 0.0
        %v2361 = vadd.f32 %v2359, %v2360
        %v2362 = vsel %vm1638, %v2301, 0.0
        %v2363 = vadd.f32 %v2361, %v2362
        %v2364 = vsel %vm1638, %v2302, 0.0
        %v2365 = vadd.f32 %v2363, %v2364
        %v2366 = vrot.slane %v2365, 4
        %v2367 = vadd.f32 %v2365, %v2366
        %v2368 = vrot.slane %v2367, 2
        %v2369 = vadd.f32 %v2367, %v2368
        %v2370 = vrot.slane %v2369, 1
        %v2371 = vadd.f32 %v2369, %v2370
        %2372 = vst.msk [vmem:[%s171 + $0x1] sm:$0x1] %vm2269, %v2371
        %2373 = vst.msk [vmem:[%s181] sm:$0xff] %vm1638, %v2042
        %2374 = vst.msk [vmem:[%s181 + $0x8] sm:$0xff] %vm1638, %v2047
        %2375 = vst.msk [vmem:[%s181 + $0x10] sm:$0xff] %vm1638, %v2052
        %2376 = vst.msk [vmem:[%s181 + $0x18] sm:$0xff] %vm1638, %v2057
        %2377 = vst.msk [vmem:[%s181 + $0x20] sm:$0xff] %vm1638, %v2062
        %2378 = vst.msk [vmem:[%s181 + $0x28] sm:$0xff] %vm1638, %v2067
        %2379 = vst.msk [vmem:[%s181 + $0x30] sm:$0xff] %vm1638, %v2072
        %2380 = vst.msk [vmem:[%s181 + $0x38] sm:$0xff] %vm1638, %v2077
        %2381 = vst.msk [vmem:[%s181 + $0x40] sm:$0xff] %vm1638, %v2082
        %2382 = vst.msk [vmem:[%s181 + $0x48] sm:$0xff] %vm1638, %v2087
        %2383 = vst.msk [vmem:[%s181 + $0x50] sm:$0xff] %vm1638, %v2092
        %2384 = vst.msk [vmem:[%s181 + $0x58] sm:$0xff] %vm1638, %v2097
        %2385 = vst.msk [vmem:[%s181 + $0x60] sm:$0xff] %vm1638, %v2102
        %2386 = vst.msk [vmem:[%s181 + $0x68] sm:$0xff] %vm1638, %v2107
        %2387 = vst.msk [vmem:[%s181 + $0x70] sm:$0xff] %vm1638, %v2112
        %2388 = vst.msk [vmem:[%s181 + $0x78] sm:$0xff] %vm1638, %v2117
        %2389 = vst.msk [vmem:[%s181 + $0x80] sm:$0xff] %vm1638, %v2122
        %2390 = vst.msk [vmem:[%s181 + $0x88] sm:$0xff] %vm1638, %v2127
        %2391 = vst.msk [vmem:[%s181 + $0x90] sm:$0xff] %vm1638, %v2132
        %2392 = vst.msk [vmem:[%s181 + $0x98] sm:$0xff] %vm1638, %v2137
        %2393 = vst.msk [vmem:[%s181 + $0xa0] sm:$0xff] %vm1638, %v2142
        %2394 = vst.msk [vmem:[%s181 + $0xa8] sm:$0xff] %vm1638, %v2147
        %2395 = vst.msk [vmem:[%s181 + $0xb0] sm:$0xff] %vm1638, %v2152
        %2396 = vst.msk [vmem:[%s181 + $0xb8] sm:$0xff] %vm1638, %v2157
        %2397 = vst.msk [vmem:[%s181 + $0xc0] sm:$0xff] %vm1638, %v2162
        %2398 = vst.msk [vmem:[%s181 + $0xc8] sm:$0xff] %vm1638, %v2167
        %2399 = vst.msk [vmem:[%s181 + $0xd0] sm:$0xff] %vm1638, %v2172
        %2400 = vst.msk [vmem:[%s181 + $0xd8] sm:$0xff] %vm1638, %v2177
        %2401 = vst.msk [vmem:[%s181 + $0xe0] sm:$0xff] %vm1638, %v2182
        %2402 = vst.msk [vmem:[%s181 + $0xe8] sm:$0xff] %vm1638, %v2187
        %2403 = vst.msk [vmem:[%s181 + $0xf0] sm:$0xff] %vm1638, %v2192
        %2404 = vst.msk [vmem:[%s181 + $0xf8] sm:$0xff] %vm1638, %v2197
        %p2405 = scmp.lt.s32.totalorder %s18, 1
        %s2406 = scalar_select %p2405, %s18, 1
        %s2407 = smul.addr %s2406, 32
        %s2408 = smul.addr %s2407, 8
        %s2409 = scalar_lea.vmem %s2, %s2408
        %s2410 = sand.u32 %s99, 1
        %s2411 = scalar_lea.sflag [#allocation4], %s2410
        %s2412 = sand.u32 %s99, 1
        %s2413 = smul.addr %s2412, 2
        %s2414 = scalar_lea.vmem [#allocation3], %s2413
        // Predicated region
        $region29: #{tpu_custom_call.1} parent=27 // pred_check
          %p2415 = pneg %p83
        $region30: #{tpu_custom_call.1} parent=27 // pred_check_branch
          %2417 = sbr.rel (%p2415) target = $region32
        $region31: #{tpu_custom_call.1} parent=27 // pred_region
          _
        $region32: #{tpu_custom_call.1} parent=27 // pred_fallthru
          _
        // Predicated region
        $region33: #{tpu_custom_call.1} parent=27 // pred_check
          %p2418 = pneg %p109
        $region34: #{tpu_custom_call.1} parent=27 // pred_check_branch
          %2420 = sbr.rel (%p2418) target = $region36
        $region35: #{tpu_custom_call.1} parent=27 // pred_region
          %s2422 = ssub.s32 32, 32
          %2423 = vsyncadd %s2411, %s2422
          %s2424 = smul.addr %s18, 32
          %s2425 = scalar_lea.hbm %s3, %s2424
          %s2427 = sshll.u32 %s2414, 4
          %s2428 = int_to_ptr.vmem [resolvable:$true] %s2427
          %2430 = dma.vmem_to_hbm [thread:$0]  %s2428, 32, %s2425, %s2411
        $region36: #{tpu_custom_call.1} parent=27 // pred_fallthru
          _
      $region28: #{tpu_custom_call.1} parent=5 // pred_fallthru
        _
      %p2431 = scmp.le.s32.totalorder 2, %s13
      // Predicated region
      $region37: #{tpu_custom_call.1} parent=5 // pred_check
        %p2432 = pneg %p2431
      $region38: #{tpu_custom_call.1} parent=5 // pred_check_branch
        %2434 = sbr.rel (%p2432) target = $region40
      $region39: #{tpu_custom_call.1} parent=5 // pred_region
        %s2435 = ssub.s32 %s13, 2
        // Predicated region
        $region41: #{tpu_custom_call.1} parent=39 // pred_check
          %p2436 = pneg %p89
        $region42: #{tpu_custom_call.1} parent=39 // pred_check_branch
          %2438 = sbr.rel (%p2436) target = $region44
        $region43: #{tpu_custom_call.1} parent=39 // pred_region
          %p2439 = scmp.lt.s32.totalorder %s19, 1
          %s2440 = scalar_select %p2439, %s19, 1
          %s2441 = smul.addr %s2440, 32
          %s2442 = smul.addr %s2441, 8
          %s2443 = scalar_lea.vmem %s2, %s2442
        $region44: #{tpu_custom_call.1} parent=39 // pred_fallthru
          _
        // Predicated region
        $region45: #{tpu_custom_call.1} parent=39 // pred_check
          %p2444 = pneg %p115
        $region46: #{tpu_custom_call.1} parent=39 // pred_check_branch
          %2446 = sbr.rel (%p2444) target = $region48
        $region47: #{tpu_custom_call.1} parent=39 // pred_region
          %s2447 = sand.u32 %s100, 1
          %s2448 = scalar_lea.sflag [#allocation4], %s2447
          %s2449 = sand.u32 %s100, 1
          %s2450 = smul.addr %s2449, 2
          %s2451 = scalar_lea.vmem [#allocation3], %s2450
          %2452 = dma.done %s2448, 32
        $region48: #{tpu_custom_call.1} parent=39 // pred_fallthru
          _
      $region40: #{tpu_custom_call.1} parent=5 // pred_fallthru
        _
    $region6: #{tpu_custom_call.1} parent=1 // loop_footer
      %s17 = sadd.s32 1, %s13
    $region7: #{tpu_custom_call.1} parent=1 // loop_footer_branch
      %12 = sbr.rel target = $region3
    $region8: #{tpu_custom_call.1} parent=1 // loop_exit
      _
    %2453 = vsyncpa [#allocation4], 1
    %s2454 = scalar_lea.sflag [#allocation4], 1
    %2455 = vsyncpa %s2454, 1

</llo_original>
